<compile_context>
chip_gen: v7x
topology: tpu7x:2x2x1
jax: 0.10.0
libtpu: 0.0.40
codegen_flags: <defaults>
</compile_context>

<pallas_src>
import functools

import jax
import jax.numpy as jnp
from jax import lax
from jax.experimental import pallas as pl
from jax.experimental.pallas import tpu as pltpu

# ----- model hyper-parameters (small, consistent with Mamba defaults) -----
D_MODEL = 32
EXPAND = 2
D_INNER = EXPAND * D_MODEL          # 64
D_STATE = 16
D_CONV = 4
DT_RANK = max(1, (D_MODEL + 15) // 16)   # ceil(d_model / 16) = 2
LN_EPS = 1e-5
CHUNK = 8                                # scan chunk == sublane tile


def _silu(x):
    return x * jax.nn.sigmoid(x)


# =====================================================================
# Fused kernel: (add residual) -> LayerNorm -> Mamba mixer
# One grid step processes BB batch rows, flattened to (BB*Lp, ...) tiles.
# =====================================================================
def _block_kernel(has_residual, BB, Lp, *refs):
    if has_residual:
        h_ref, r_ref = refs[0], refs[1]
        refs = refs[2:]
    else:
        h_ref, r_ref = refs[0], None
        refs = refs[1:]
    (ln_w_ref, ln_b_ref, w_in_ref, conv_w_ref, conv_b_ref, w_xp_ref,
     b_dt_ref, a_log_t_ref, d_ref, w_out_ref,
     out_ref, scr_in, scr_y) = refs

    S, DI = D_STATE, D_INNER
    nrows = BB * Lp
    lanes = BB * DI

    # ---- residual add (skipped for the very first block) ----
    x = h_ref[...]                                       # (BB*Lp, D) fp32
    if has_residual:
        x = x + r_ref[...]

    # ---- LayerNorm ----
    mean = jnp.mean(x, axis=-1, keepdims=True)
    var = jnp.mean(jnp.square(x - mean), axis=-1, keepdims=True)
    xn = (x - mean) * lax.rsqrt(var + LN_EPS)
    xn = xn * ln_w_ref[...] + ln_b_ref[...]

    # ---- in_proj (no bias): (BB*Lp, D) @ (D, 2*d_inner) ----
    xz = jnp.dot(xn, w_in_ref[...], preferred_element_type=jnp.float32)
    xc = xz[:, :DI]                                      # conv branch
    z = xz[:, DI:]                                       # gate branch

    # ---- causal depthwise conv1d + SiLU (tap-major weights) ----
    # width-1 position-within-sequence column (cheap compares / selects)
    pos = lax.broadcasted_iota(jnp.int32, (nrows, 1), 0)
    for _ in range(1, BB):
        pos = jnp.where(pos >= Lp, pos - Lp, pos)        # pos = row mod Lp

    conv_w = conv_w_ref[...]                             # (d_conv, d_inner)
    acc = xc * conv_w[D_CONV - 1:D_CONV, :]              # tap with shift 0
    for kk in range(D_CONV - 1):
        shift = D_CONV - 1 - kk
        xs = jnp.where(pos >= shift, pltpu.roll(xc, shift, axis=0), 0.0)
        acc = acc + xs * conv_w[kk:kk + 1, :]
    u = _silu(acc + conv_b_ref[...])                     # (BB*Lp, d_inner)

    # ---- folded x_proj -> [dt_pre | B | C]; softplus dt ----
    x_dbl = jnp.dot(u, w_xp_ref[...], preferred_element_type=jnp.float32)
    dt = jax.nn.softplus(x_dbl[:, :DI] + b_dt_ref[...])  # (rows, DI)
    Bm = x_dbl[:, DI:DI + S]                             # (rows, S)
    Cm = x_dbl[:, DI + S:]                               # (rows, S)
    dtu = dt * u

    # ---- repack scan inputs once: time-major, batch folded into lanes ----
    def fold(v):                                         # (BB*Lp, W) -> (Lp, BB*W)
        if BB == 1:
            return v
        return jnp.concatenate([v[b * Lp:(b + 1) * Lp, :] for b in range(BB)],
                               axis=-1)

    scr_in[...] = jnp.concatenate([fold(dt), fold(dtu), fold(Bm), fold(Cm)],
                                  axis=-1)               # (Lp, 2*BB*DI + 2*BB*S)

    a_t = -jnp.exp(a_log_t_ref[...])                     # (S, DI)
    a_bt = a_t if BB == 1 else jnp.concatenate([a_t] * BB, axis=-1)  # (S, lanes)

    o_dtu = BB * DI
    o_b = 2 * BB * DI
    o_c = o_b + BB * S
    n_chunks = Lp // CHUNK

    # ---- chunked selective scan: serial chain = L steps of vmul+vadd only ----
    def chunk_body(c, h):
        off = pl.multiple_of(c * CHUNK, CHUNK)
        blk = scr_in[pl.ds(off, CHUNK), :]               # (CHUNK, in_w)
        dt_c = blk[:, 0:lanes]
        dtu_c = blk[:, o_dtu:o_dtu + lanes]
        B_c = blk[:, o_b:o_b + BB * S]
        C_c = blk[:, o_c:o_c + BB * S]

        # parallel precompute (off the serial h-dependence chain)
        dA = jnp.exp(dt_c[:, None, :] * a_bt[None, :, :])          # (CHUNK,S,lanes)
        dBu_parts = [B_c[:, b * S:(b + 1) * S][:, :, None]
                     * dtu_c[:, None, b * DI:(b + 1) * DI]
                     for b in range(BB)]
        dBu = dBu_parts[0] if BB == 1 else jnp.concatenate(dBu_parts, axis=-1)

        hs = []
        for k in range(CHUNK):                           # unrolled; chain = FMA only
            h = dA[k] * h + dBu[k]
            hs.append(h)

        # off-chain C*h contraction + one full-tile y store per chunk
        h_stack = jnp.concatenate([hk[None, :, :] for hk in hs], axis=0)
        y_parts = [jnp.sum(C_c[:, b * S:(b + 1) * S][:, :, None]
                           * h_stack[:, :, b * DI:(b + 1) * DI], axis=1)
                   for b in range(BB)]                   # (CHUNK, DI) each
        y_c = y_parts[0] if BB == 1 else jnp.concatenate(y_parts, axis=-1)
        scr_y[pl.ds(off, CHUNK), :] = y_c
        return h

    lax.fori_loop(0, n_chunks, chunk_body, jnp.zeros((S, lanes), jnp.float32))

    # unfold y back to row-major (BB*Lp, DI)
    y_tm = scr_y[...]                                    # (Lp, BB*DI)
    if BB == 1:
        y = y_tm
    else:
        y = jnp.concatenate([y_tm[:, b * DI:(b + 1) * DI] for b in range(BB)],
                            axis=0)

    # ---- D skip connection, SiLU gate, out_proj; packed [out | residual] ----
    y = y + u * d_ref[...]
    y = y * _silu(z)
    out = jnp.dot(y, w_out_ref[...], preferred_element_type=jnp.float32)
    out_ref[...] = jnp.concatenate([out, x], axis=-1)    # (rows, 2*D)


# =====================================================================
# Block forward wrapper (single fused pallas_call)
# =====================================================================
def block_forward(hidden_states, residual, params, *, batch_block=None,
                  max_rows=4096):
    B, L, D = hidden_states.shape
    assert D == D_MODEL
    Lp = ((L + CHUNK - 1) // CHUNK) * CHUNK              # pad L to multiple of 8

    def pad(t):
        t = t.astype(jnp.float32)
        if Lp == L:
            return t
        return jnp.pad(t, ((0, 0), (0, Lp - L), (0, 0)))

    has_residual = residual is not None
    data = [pad(hidden_states).reshape(B * Lp, D)]
    if has_residual:
        data.append(pad(residual).reshape(B * Lp, D))

    # choose BB: divides B, keeps grid >= 2 when B >= 2 (v7x megacore), caps rows
    if batch_block is None:
        BB = 1
        for bb in range(1, B + 1):
            if B % bb:
                continue
            if bb * Lp > max_rows:
                continue
            if B >= 2 and B // bb < 2:
                continue
            BB = bb
    else:
        BB = batch_block
    assert B % BB == 0 and (BB * Lp) % 8 == 0

    # fold dt_proj into x_proj: one matmul yields [dt_pre | B | C]
    w_xp = jnp.concatenate(
        [jnp.dot(params['w_xproj'][:, :DT_RANK], params['w_dtproj']),
         params['w_xproj'][:, DT_RANK:]], axis=-1)       # (DI, DI + 2*S)

    weights = [params['ln_w'], params['ln_b'], params['w_in'], params['conv_w'],
               params['conv_b'], w_xp, params['b_dtproj'],
               jnp.transpose(params['a_log']),           # (S, DI)
               params['d'], params['w_out']]

    data_spec = pl.BlockSpec((BB * Lp, D), lambda g: (g, 0))
    out_spec = pl.BlockSpec((BB * Lp, 2 * D), lambda g: (g, 0))
    in_specs = ([data_spec] * len(data)
                + [pl.BlockSpec(w.shape, lambda g: (0, 0)) for w in weights])

    in_w = 2 * BB * D_INNER + 2 * BB * D_STATE
    kernel = functools.partial(_block_kernel, has_residual, BB, Lp)
    packed = pl.pallas_call(
        kernel,
        out_shape=jax.ShapeDtypeStruct((B * Lp, 2 * D), jnp.float32),
        grid=(B // BB,),
        in_specs=in_specs,
        out_specs=out_spec,
        scratch_shapes=[pltpu.VMEM((Lp, in_w), jnp.float32),        # [dt|dtu|B|C]
                        pltpu.VMEM((Lp, BB * D_INNER), jnp.float32)],  # y (time-major)
        compiler_params=pltpu.CompilerParams(
            dimension_semantics=("parallel",),
            vmem_limit_bytes=48 * 1024 * 1024),
    )(*data, *weights)

    packed = packed.reshape(B, Lp, 2 * D)[:, :L]
    return packed[..., :D], packed[..., D:]


# =====================================================================
# Pure-JAX reference (unfused dt_proj, per-timestep scan)
# =====================================================================
def _mamba_ref_single(x, p):
    L = x.shape[0]
    xz = jnp.dot(x, p['w_in'], preferred_element_type=jnp.float32)
    xc, z = xz[:, :D_INNER], xz[:, D_INNER:]
    acc = jnp.zeros((L, D_INNER), jnp.float32)
    for k in range(D_CONV):
        shift = D_CONV - 1 - k
        xs = xc if shift == 0 else jnp.concatenate(
            [jnp.zeros((shift, D_INNER), jnp.float32), xc[:L - shift]], axis=0)
        acc = acc + xs * p['conv_w'][k][None, :]
    u = _silu(acc + p['conv_b'])
    x_dbl = jnp.dot(u, p['w_xproj'], preferred_element_type=jnp.float32)
    dt = jax.nn.softplus(jnp.dot(x_dbl[:, :DT_RANK], p['w_dtproj'],
                                 preferred_element_type=jnp.float32)
                         + p['b_dtproj'])
    Bm = x_dbl[:, DT_RANK:DT_RANK + D_STATE]
    Cm = x_dbl[:, DT_RANK + D_STATE:]
    A = -jnp.exp(p['a_log'])                             # (d_inner, d_state)

    def step(h, inp):
        dt_l, u_l, B_l, C_l = inp
        dA = jnp.exp(dt_l[:, None] * A)
        dBu = (dt_l * u_l)[:, None] * B_l[None, :]
        h = dA * h + dBu
        return h, h @ C_l

    _, ys = lax.scan(step, jnp.zeros((D_INNER, D_STATE), jnp.float32),
                     (dt, u, Bm, Cm))
    y = ys + u * p['d']
    y = y * _silu(z)
    return jnp.dot(y, p['w_out'], preferred_element_type=jnp.float32)


def block_forward_ref(hidden_states, residual, params):
    resid = hidden_states if residual is None else hidden_states + residual
    mean = jnp.mean(resid, axis=-1, keepdims=True)
    var = jnp.mean((resid - mean) ** 2, axis=-1, keepdims=True)
    normed = (resid - mean) / jnp.sqrt(var + LN_EPS) * params['ln_w'] + params['ln_b']
    out = jax.vmap(lambda xb: _mamba_ref_single(xb, params))(normed)
    return out, resid


def init_params(key):
    ks = jax.random.split(key, 8)
    s = 0.4
    p = {
        'ln_w': 1.0 + 0.1 * jax.random.normal(ks[0], (1, D_MODEL), jnp.float32),
        'ln_b': 0.05 * jax.random.normal(ks[1], (1, D_MODEL), jnp.float32),
        'w_in': s * jax.random.normal(ks[2], (D_MODEL, 2 * D_INNER), jnp.float32),
        # tap-major (d_conv, d_inner): lane-dense conv taps
        'conv_w': s * jax.random.normal(ks[3], (D_CONV, D_INNER), jnp.float32),
        'conv_b': 0.1 * jax.random.normal(ks[4], (1, D_INNER), jnp.float32),
        'w_xproj': s * jax.random.normal(ks[5], (D_INNER, DT_RANK + 2 * D_STATE),
                                         jnp.float32),
        'w_dtproj': s * jax.random.normal(ks[6], (DT_RANK, D_INNER), jnp.float32),
        'b_dtproj': 0.2 * jax.random.normal(ks[7], (1, D_INNER), jnp.float32),
        # S4D-real init: A_log[i, s] = log(s + 1)
        'a_log': jnp.log(jnp.tile(jnp.arange(1, D_STATE + 1, dtype=jnp.float32)[None, :],
                                  (D_INNER, 1))),
        'd': jnp.ones((1, D_INNER), jnp.float32),
        'w_out': s * jax.random.normal(jax.random.fold_in(key, 99),
                                       (D_INNER, D_MODEL), jnp.float32),
    }
    return p


if __name__ == "__main__":
    key = jax.random.PRNGKey(0)
    k_h, k_r, k_p = jax.random.split(key, 3)
    params = init_params(k_p)

    # (B=2, L=8): BB=1, grid=2.  (B=4, L=12): padded Lp=16, BB=2 (batch folded
    # into lanes, 128-lane scan), grid=2, two chunks.
    for (B, L) in [(2, 8), (4, 12)]:
        kh = jax.random.fold_in(k_h, 100 * B + L)
        kr = jax.random.fold_in(k_r, 100 * B + L)
        hidden_states = jax.random.normal(kh, (B, L, D_MODEL), jnp.float32)
        residual = jax.random.normal(kr, (B, L, D_MODEL), jnp.float32)

        # normal path (residual provided)
        out_h, out_r = block_forward(hidden_states, residual, params)
        jax.block_until_ready((out_h, out_r))
        ref_h, ref_r = block_forward_ref(hidden_states, residual, params)
        assert out_h.shape == (B, L, D_MODEL) and out_r.shape == (B, L, D_MODEL)
        assert jnp.allclose(out_r, ref_r, atol=1e-5, rtol=1e-5)
        assert jnp.allclose(out_h, ref_h, atol=1e-2, rtol=1e-2)

        # first-block path (residual is None) — dedicated no-add kernel variant
        out_h0, out_r0 = block_forward(hidden_states, None, params)
        jax.block_until_ready((out_h0, out_r0))
        ref_h0, ref_r0 = block_forward_ref(hidden_states, None, params)
        assert jnp.allclose(out_r0, ref_r0, atol=1e-5, rtol=1e-5)
        assert jnp.allclose(out_h0, ref_h0, atol=1e-2, rtol=1e-2)

    print("KERNEL_OK")
</pallas_src>

<mosaic_0001>
module attributes {stable_mosaic.version = 11 : i64} {
  func.func @_block_kernel(%arg0: i32, %arg1: memref<8x32xf32, #tpu.memory_space<vmem>>, %arg2: memref<8x32xf32, #tpu.memory_space<vmem>>, %arg3: memref<1x32xf32, #tpu.memory_space<vmem>>, %arg4: memref<1x32xf32, #tpu.memory_space<vmem>>, %arg5: memref<32x128xf32, #tpu.memory_space<vmem>>, %arg6: memref<4x64xf32, #tpu.memory_space<vmem>>, %arg7: memref<1x64xf32, #tpu.memory_space<vmem>>, %arg8: memref<64x96xf32, #tpu.memory_space<vmem>>, %arg9: memref<1x64xf32, #tpu.memory_space<vmem>>, %arg10: memref<16x64xf32, #tpu.memory_space<vmem>>, %arg11: memref<1x64xf32, #tpu.memory_space<vmem>>, %arg12: memref<64x32xf32, #tpu.memory_space<vmem>>, %arg13: memref<8x64xf32, #tpu.memory_space<vmem>>, %arg14: memref<8x160xf32, #tpu.memory_space<vmem>>, %arg15: memref<8x64xf32, #tpu.memory_space<vmem>>) attributes {dimension_semantics = [#tpu.dimension_semantics<parallel>], iteration_bounds = array<i64: 2>, scalar_prefetch = 0 : i64, scratch_operands = 2 : i64, tpu.core_type = #tpu.core_type<tc>, window_params = [{transform_indices = @transform_0, window_bounds = array<i64: 8, 32>}, {transform_indices = @transform_1, window_bounds = array<i64: 8, 32>}, {pipeline_mode = #tpu.pipeline_mode<synchronous>, transform_indices = @transform_2, window_bounds = array<i64: 1, 32>}, {pipeline_mode = #tpu.pipeline_mode<synchronous>, transform_indices = @transform_3, window_bounds = array<i64: 1, 32>}, {pipeline_mode = #tpu.pipeline_mode<synchronous>, transform_indices = @transform_4, window_bounds = array<i64: 32, 128>}, {pipeline_mode = #tpu.pipeline_mode<synchronous>, transform_indices = @transform_5, window_bounds = array<i64: 4, 64>}, {pipeline_mode = #tpu.pipeline_mode<synchronous>, transform_indices = @transform_6, window_bounds = array<i64: 1, 64>}, {pipeline_mode = #tpu.pipeline_mode<synchronous>, transform_indices = @transform_7, window_bounds = array<i64: 64, 96>}, {pipeline_mode = #tpu.pipeline_mode<synchronous>, transform_indices = @transform_8, window_bounds = array<i64: 1, 64>}, {pipeline_mode = #tpu.pipeline_mode<synchronous>, transform_indices = @transform_9, window_bounds = array<i64: 16, 64>}, {pipeline_mode = #tpu.pipeline_mode<synchronous>, transform_indices = @transform_10, window_bounds = array<i64: 1, 64>}, {pipeline_mode = #tpu.pipeline_mode<synchronous>, transform_indices = @transform_11, window_bounds = array<i64: 64, 32>}, {transform_indices = @transform_12, window_bounds = array<i64: 8, 64>}]} {
    %c0 = arith.constant 0 : index
    %c0_0 = arith.constant 0 : index
    %0 = vector.load %arg1[%c0, %c0_0] : memref<8x32xf32, #tpu.memory_space<vmem>>, vector<8x32xf32>
    %c0_1 = arith.constant 0 : index
    %c0_2 = arith.constant 0 : index
    %1 = vector.load %arg2[%c0_1, %c0_2] : memref<8x32xf32, #tpu.memory_space<vmem>>, vector<8x32xf32>
    %2 = arith.addf %0, %1 : vector<8x32xf32>
    %cst = arith.constant dense<0.000000e+00> : vector<8xf32>
    %3 = vector.multi_reduction <add>, %2, %cst [1] : vector<8x32xf32> to vector<8xf32>
    %4 = vector.shape_cast %3 : vector<8xf32> to vector<8x1xf32>
    %cst_3 = arith.constant 3.200000e+01 : f32
    %5 = vector.broadcast %cst_3 : f32 to vector<8x1xf32>
    %6 = arith.divf %4, %5 : vector<8x1xf32>
    %7 = vector.broadcast %6 : vector<8x1xf32> to vector<8x32xf32>
    %8 = arith.subf %2, %7 : vector<8x32xf32>
    %9 = arith.mulf %8, %8 : vector<8x32xf32>
    %cst_4 = arith.constant dense<0.000000e+00> : vector<8xf32>
    %10 = vector.multi_reduction <add>, %9, %cst_4 [1] : vector<8x32xf32> to vector<8xf32>
    %11 = vector.shape_cast %10 : vector<8xf32> to vector<8x1xf32>
    %cst_5 = arith.constant 3.200000e+01 : f32
    %12 = vector.broadcast %cst_5 : f32 to vector<8x1xf32>
    %13 = arith.divf %11, %12 : vector<8x1xf32>
    %14 = vector.broadcast %6 : vector<8x1xf32> to vector<8x32xf32>
    %15 = arith.subf %2, %14 : vector<8x32xf32>
    %cst_6 = arith.constant 9.99999974E-6 : f32
    %16 = vector.broadcast %cst_6 : f32 to vector<8x1xf32>
    %17 = arith.addf %13, %16 : vector<8x1xf32>
    %18 = math.rsqrt %17 : vector<8x1xf32>
    %19 = vector.broadcast %18 : vector<8x1xf32> to vector<8x32xf32>
    %20 = arith.mulf %15, %19 : vector<8x32xf32>
    %c0_7 = arith.constant 0 : index
    %c0_8 = arith.constant 0 : index
    %21 = vector.load %arg3[%c0_7, %c0_8] : memref<1x32xf32, #tpu.memory_space<vmem>>, vector<1x32xf32>
    %22 = vector.broadcast %21 : vector<1x32xf32> to vector<8x32xf32>
    %23 = arith.mulf %20, %22 : vector<8x32xf32>
    %c0_9 = arith.constant 0 : index
    %c0_10 = arith.constant 0 : index
    %24 = vector.load %arg4[%c0_9, %c0_10] : memref<1x32xf32, #tpu.memory_space<vmem>>, vector<1x32xf32>
    %25 = vector.broadcast %24 : vector<1x32xf32> to vector<8x32xf32>
    %26 = arith.addf %23, %25 : vector<8x32xf32>
    %c0_11 = arith.constant 0 : index
    %c0_12 = arith.constant 0 : index
    %27 = vector.load %arg5[%c0_11, %c0_12] : memref<32x128xf32, #tpu.memory_space<vmem>>, vector<32x128xf32>
    %cst_13 = arith.constant dense<0.000000e+00> : vector<8x128xf32>
    %28 = tpu.matmul %26, %27, %cst_13 {dimension_numbers = #tpu.dot_dimension_numbers<[1], [0], [0], [1], [0, 0, 1, 1], [], []>} : vector<8x32xf32>, vector<32x128xf32>, vector<8x128xf32> -> vector<8x128xf32>
    %29 = vector.extract_strided_slice %28 {offsets = [0, 0], sizes = [8, 64], strides = [1, 1]} : vector<8x128xf32> to vector<8x64xf32>
    %30 = vector.extract_strided_slice %28 {offsets = [0, 64], sizes = [8, 64], strides = [1, 1]} : vector<8x128xf32> to vector<8x64xf32>
    %31 = tpu.iota {dimensions = array<i32: 0>} : vector<8x1xi32>
    %c0_14 = arith.constant 0 : index
    %c0_15 = arith.constant 0 : index
    %32 = vector.load %arg6[%c0_14, %c0_15] : memref<4x64xf32, #tpu.memory_space<vmem>>, vector<4x64xf32>
    %33 = vector.extract_strided_slice %32 {offsets = [3, 0], sizes = [1, 64], strides = [1, 1]} : vector<4x64xf32> to vector<1x64xf32>
    %34 = vector.broadcast %33 : vector<1x64xf32> to vector<8x64xf32>
    %35 = arith.mulf %29, %34 : vector<8x64xf32>
    %c3_i32 = arith.constant 3 : i32
    %36 = vector.broadcast %c3_i32 : i32 to vector<8x1xi32>
    %37 = arith.cmpi sge, %31, %36 : vector<8x1xi32>
    %c3_i32_16 = arith.constant 3 : i32
    %38 = tpu.dynamic_rotate %29 by %c3_i32_16 dim 0 : vector<8x64xf32>, i32 -> vector<8x64xf32>
    %cst_17 = arith.constant 0.000000e+00 : f32
    %39 = vector.shape_cast %37 : vector<8x1xi1> to vector<8x1xi1>
    %40 = vector.broadcast %39 : vector<8x1xi1> to vector<8x64xi1>
    %41 = vector.broadcast %cst_17 : f32 to vector<8x64xf32>
    %42 = arith.select %40, %38, %41 : vector<8x64xi1>, vector<8x64xf32>
    %43 = vector.extract_strided_slice %32 {offsets = [0, 0], sizes = [1, 64], strides = [1, 1]} : vector<4x64xf32> to vector<1x64xf32>
    %44 = vector.broadcast %43 : vector<1x64xf32> to vector<8x64xf32>
    %45 = arith.mulf %42, %44 : vector<8x64xf32>
    %46 = arith.addf %35, %45 : vector<8x64xf32>
    %c2_i32 = arith.constant 2 : i32
    %47 = vector.broadcast %c2_i32 : i32 to vector<8x1xi32>
    %48 = arith.cmpi sge, %31, %47 : vector<8x1xi32>
    %c2_i32_18 = arith.constant 2 : i32
    %49 = tpu.dynamic_rotate %29 by %c2_i32_18 dim 0 : vector<8x64xf32>, i32 -> vector<8x64xf32>
    %cst_19 = arith.constant 0.000000e+00 : f32
    %50 = vector.shape_cast %48 : vector<8x1xi1> to vector<8x1xi1>
    %51 = vector.broadcast %50 : vector<8x1xi1> to vector<8x64xi1>
    %52 = vector.broadcast %cst_19 : f32 to vector<8x64xf32>
    %53 = arith.select %51, %49, %52 : vector<8x64xi1>, vector<8x64xf32>
    %54 = vector.extract_strided_slice %32 {offsets = [1, 0], sizes = [1, 64], strides = [1, 1]} : vector<4x64xf32> to vector<1x64xf32>
    %55 = vector.broadcast %54 : vector<1x64xf32> to vector<8x64xf32>
    %56 = arith.mulf %53, %55 : vector<8x64xf32>
    %57 = arith.addf %46, %56 : vector<8x64xf32>
    %c1_i32 = arith.constant 1 : i32
    %58 = vector.broadcast %c1_i32 : i32 to vector<8x1xi32>
    %59 = arith.cmpi sge, %31, %58 : vector<8x1xi32>
    %c1_i32_20 = arith.constant 1 : i32
    %60 = tpu.dynamic_rotate %29 by %c1_i32_20 dim 0 : vector<8x64xf32>, i32 -> vector<8x64xf32>
    %cst_21 = arith.constant 0.000000e+00 : f32
    %61 = vector.shape_cast %59 : vector<8x1xi1> to vector<8x1xi1>
    %62 = vector.broadcast %61 : vector<8x1xi1> to vector<8x64xi1>
    %63 = vector.broadcast %cst_21 : f32 to vector<8x64xf32>
    %64 = arith.select %62, %60, %63 : vector<8x64xi1>, vector<8x64xf32>
    %65 = vector.extract_strided_slice %32 {offsets = [2, 0], sizes = [1, 64], strides = [1, 1]} : vector<4x64xf32> to vector<1x64xf32>
    %66 = vector.broadcast %65 : vector<1x64xf32> to vector<8x64xf32>
    %67 = arith.mulf %64, %66 : vector<8x64xf32>
    %68 = arith.addf %57, %67 : vector<8x64xf32>
    %c0_22 = arith.constant 0 : index
    %c0_23 = arith.constant 0 : index
    %69 = vector.load %arg7[%c0_22, %c0_23] : memref<1x64xf32, #tpu.memory_space<vmem>>, vector<1x64xf32>
    %70 = vector.broadcast %69 : vector<1x64xf32> to vector<8x64xf32>
    %71 = arith.addf %68, %70 : vector<8x64xf32>
    %72 = arith.negf %71 : vector<8x64xf32>
    %73 = math.exp %72 : vector<8x64xf32>
    %cst_24 = arith.constant 1.000000e+00 : f32
    %74 = vector.broadcast %cst_24 : f32 to vector<8x64xf32>
    %75 = arith.addf %74, %73 : vector<8x64xf32>
    %76 = arith.divf %74, %75 : vector<8x64xf32>
    %77 = arith.mulf %71, %76 : vector<8x64xf32>
    %c0_25 = arith.constant 0 : index
    %c0_26 = arith.constant 0 : index
    %78 = vector.load %arg8[%c0_25, %c0_26] : memref<64x96xf32, #tpu.memory_space<vmem>>, vector<64x96xf32>
    %cst_27 = arith.constant dense<0.000000e+00> : vector<8x96xf32>
    %79 = tpu.matmul %77, %78, %cst_27 {dimension_numbers = #tpu.dot_dimension_numbers<[1], [0], [0], [1], [0, 0, 1, 1], [], []>} : vector<8x64xf32>, vector<64x96xf32>, vector<8x96xf32> -> vector<8x96xf32>
    %80 = vector.extract_strided_slice %79 {offsets = [0, 0], sizes = [8, 64], strides = [1, 1]} : vector<8x96xf32> to vector<8x64xf32>
    %c0_28 = arith.constant 0 : index
    %c0_29 = arith.constant 0 : index
    %81 = vector.load %arg9[%c0_28, %c0_29] : memref<1x64xf32, #tpu.memory_space<vmem>>, vector<1x64xf32>
    %82 = vector.broadcast %81 : vector<1x64xf32> to vector<8x64xf32>
    %83 = arith.addf %80, %82 : vector<8x64xf32>
    %cst_30 = arith.constant 0.000000e+00 : f32
    %84 = vector.broadcast %cst_30 : f32 to vector<8x64xf32>
    %85 = arith.maximumf %83, %84 : vector<8x64xf32>
    %86 = vector.broadcast %cst_30 : f32 to vector<8x64xf32>
    %87 = arith.subf %83, %86 : vector<8x64xf32>
    %88 = arith.cmpf one, %87, %87 : vector<8x64xf32>
    %89 = vector.broadcast %cst_30 : f32 to vector<8x64xf32>
    %90 = arith.addf %83, %89 : vector<8x64xf32>
    %91 = math.absf %87 : vector<8x64xf32>
    %cst_31 = arith.constant 0.000000e+00 : f32
    %92 = vector.broadcast %cst_31 : f32 to vector<8x64xf32>
    %93 = arith.subf %92, %91 : vector<8x64xf32>
    %94 = math.exp %93 : vector<8x64xf32>
    %95 = math.log1p %94 : vector<8x64xf32>
    %96 = arith.addf %85, %95 : vector<8x64xf32>
    %97 = arith.select %88, %90, %96 : vector<8x64xi1>, vector<8x64xf32>
    %98 = vector.extract_strided_slice %79 {offsets = [0, 64], sizes = [8, 16], strides = [1, 1]} : vector<8x96xf32> to vector<8x16xf32>
    %99 = vector.extract_strided_slice %79 {offsets = [0, 80], sizes = [8, 16], strides = [1, 1]} : vector<8x96xf32> to vector<8x16xf32>
    %100 = arith.mulf %97, %77 : vector<8x64xf32>
    %101 = tpu.concatenate %97, %100, %98, %99 in 1 : vector<8x64xf32>, vector<8x64xf32>, vector<8x16xf32>, vector<8x16xf32> -> vector<8x160xf32>
    %c0_32 = arith.constant 0 : index
    %c0_33 = arith.constant 0 : index
    %102 = vector.load %arg14[%c0_32, %c0_33] : memref<8x160xf32, #tpu.memory_space<vmem>>, vector<8x160xf32>
    tpu.vector_store %arg14[%c0_32, %c0_33], %101 {strides = array<i32>} : memref<8x160xf32, #tpu.memory_space<vmem>>, vector<8x160xf32>,
    %c0_34 = arith.constant 0 : index
    %c0_35 = arith.constant 0 : index
    %103 = vector.load %arg10[%c0_34, %c0_35] : memref<16x64xf32, #tpu.memory_space<vmem>>, vector<16x64xf32>
    %104 = math.exp %103 : vector<16x64xf32>
    %cst_36 = arith.constant 0.000000e+00 : f32
    %105 = vector.broadcast %cst_36 : f32 to vector<16x64xf32>
    %106 = arith.subf %105, %104 : vector<16x64xf32>
    %cst_37 = arith.constant 0.000000e+00 : f32
    %107 = vector.broadcast %cst_37 : f32 to vector<16x64xf32>
    %c0_i32 = arith.constant 0 : i32
    %c8_i32 = arith.constant 8 : i32
    %108 = arith.muli %c0_i32, %c8_i32 : i32
    %109 = tpu.assume_multiple %108, 8 : i32
    %110 = arith.index_cast %109 : i32 to index
    %c0_38 = arith.constant 0 : index
    %111 = vector.load %arg14[%110, %c0_38] : memref<8x160xf32, #tpu.memory_space<vmem>>, vector<8x160xf32>
    %112 = vector.extract_strided_slice %111 {offsets = [0, 0], sizes = [8, 64], strides = [1, 1]} : vector<8x160xf32> to vector<8x64xf32>
    %113 = vector.extract_strided_slice %111 {offsets = [0, 64], sizes = [8, 64], strides = [1, 1]} : vector<8x160xf32> to vector<8x64xf32>
    %114 = vector.extract_strided_slice %111 {offsets = [0, 128], sizes = [8, 16], strides = [1, 1]} : vector<8x160xf32> to vector<8x16xf32>
    %115 = vector.extract_strided_slice %111 {offsets = [0, 144], sizes = [8, 16], strides = [1, 1]} : vector<8x160xf32> to vector<8x16xf32>
    %116 = vector.shape_cast %112 : vector<8x64xf32> to vector<8x1x64xf32>
    %117 = vector.shape_cast %106 : vector<16x64xf32> to vector<1x16x64xf32>
    %118 = vector.broadcast %116 : vector<8x1x64xf32> to vector<8x16x64xf32>
    %119 = vector.broadcast %117 : vector<1x16x64xf32> to vector<8x16x64xf32>
    %120 = arith.mulf %118, %119 : vector<8x16x64xf32>
    %121 = math.exp %120 : vector<8x16x64xf32>
    %122 = vector.shape_cast %114 : vector<8x16xf32> to vector<8x16x1xf32>
    %123 = vector.shape_cast %113 : vector<8x64xf32> to vector<8x1x64xf32>
    %124 = vector.broadcast %122 : vector<8x16x1xf32> to vector<8x16x64xf32>
    %125 = vector.broadcast %123 : vector<8x1x64xf32> to vector<8x16x64xf32>
    %126 = arith.mulf %124, %125 : vector<8x16x64xf32>
    %127 = vector.extract_strided_slice %121 {offsets = [0, 0, 0], sizes = [1, 16, 64], strides = [1, 1, 1]} : vector<8x16x64xf32> to vector<1x16x64xf32>
    %128 = vector.shape_cast %127 : vector<1x16x64xf32> to vector<16x64xf32>
    %129 = arith.mulf %128, %107 : vector<16x64xf32>
    %130 = vector.extract_strided_slice %126 {offsets = [0, 0, 0], sizes = [1, 16, 64], strides = [1, 1, 1]} : vector<8x16x64xf32> to vector<1x16x64xf32>
    %131 = vector.shape_cast %130 : vector<1x16x64xf32> to vector<16x64xf32>
    %132 = arith.addf %129, %131 : vector<16x64xf32>
    %133 = vector.extract_strided_slice %121 {offsets = [1, 0, 0], sizes = [1, 16, 64], strides = [1, 1, 1]} : vector<8x16x64xf32> to vector<1x16x64xf32>
    %134 = vector.shape_cast %133 : vector<1x16x64xf32> to vector<16x64xf32>
    %135 = arith.mulf %134, %132 : vector<16x64xf32>
    %136 = vector.extract_strided_slice %126 {offsets = [1, 0, 0], sizes = [1, 16, 64], strides = [1, 1, 1]} : vector<8x16x64xf32> to vector<1x16x64xf32>
    %137 = vector.shape_cast %136 : vector<1x16x64xf32> to vector<16x64xf32>
    %138 = arith.addf %135, %137 : vector<16x64xf32>
    %139 = vector.extract_strided_slice %121 {offsets = [2, 0, 0], sizes = [1, 16, 64], strides = [1, 1, 1]} : vector<8x16x64xf32> to vector<1x16x64xf32>
    %140 = vector.shape_cast %139 : vector<1x16x64xf32> to vector<16x64xf32>
    %141 = arith.mulf %140, %138 : vector<16x64xf32>
    %142 = vector.extract_strided_slice %126 {offsets = [2, 0, 0], sizes = [1, 16, 64], strides = [1, 1, 1]} : vector<8x16x64xf32> to vector<1x16x64xf32>
    %143 = vector.shape_cast %142 : vector<1x16x64xf32> to vector<16x64xf32>
    %144 = arith.addf %141, %143 : vector<16x64xf32>
    %145 = vector.extract_strided_slice %121 {offsets = [3, 0, 0], sizes = [1, 16, 64], strides = [1, 1, 1]} : vector<8x16x64xf32> to vector<1x16x64xf32>
    %146 = vector.shape_cast %145 : vector<1x16x64xf32> to vector<16x64xf32>
    %147 = arith.mulf %146, %144 : vector<16x64xf32>
    %148 = vector.extract_strided_slice %126 {offsets = [3, 0, 0], sizes = [1, 16, 64], strides = [1, 1, 1]} : vector<8x16x64xf32> to vector<1x16x64xf32>
    %149 = vector.shape_cast %148 : vector<1x16x64xf32> to vector<16x64xf32>
    %150 = arith.addf %147, %149 : vector<16x64xf32>
    %151 = vector.extract_strided_slice %121 {offsets = [4, 0, 0], sizes = [1, 16, 64], strides = [1, 1, 1]} : vector<8x16x64xf32> to vector<1x16x64xf32>
    %152 = vector.shape_cast %151 : vector<1x16x64xf32> to vector<16x64xf32>
    %153 = arith.mulf %152, %150 : vector<16x64xf32>
    %154 = vector.extract_strided_slice %126 {offsets = [4, 0, 0], sizes = [1, 16, 64], strides = [1, 1, 1]} : vector<8x16x64xf32> to vector<1x16x64xf32>
    %155 = vector.shape_cast %154 : vector<1x16x64xf32> to vector<16x64xf32>
    %156 = arith.addf %153, %155 : vector<16x64xf32>
    %157 = vector.extract_strided_slice %121 {offsets = [5, 0, 0], sizes = [1, 16, 64], strides = [1, 1, 1]} : vector<8x16x64xf32> to vector<1x16x64xf32>
    %158 = vector.shape_cast %157 : vector<1x16x64xf32> to vector<16x64xf32>
    %159 = arith.mulf %158, %156 : vector<16x64xf32>
    %160 = vector.extract_strided_slice %126 {offsets = [5, 0, 0], sizes = [1, 16, 64], strides = [1, 1, 1]} : vector<8x16x64xf32> to vector<1x16x64xf32>
    %161 = vector.shape_cast %160 : vector<1x16x64xf32> to vector<16x64xf32>
    %162 = arith.addf %159, %161 : vector<16x64xf32>
    %163 = vector.extract_strided_slice %121 {offsets = [6, 0, 0], sizes = [1, 16, 64], strides = [1, 1, 1]} : vector<8x16x64xf32> to vector<1x16x64xf32>
    %164 = vector.shape_cast %163 : vector<1x16x64xf32> to vector<16x64xf32>
    %165 = arith.mulf %164, %162 : vector<16x64xf32>
    %166 = vector.extract_strided_slice %126 {offsets = [6, 0, 0], sizes = [1, 16, 64], strides = [1, 1, 1]} : vector<8x16x64xf32> to vector<1x16x64xf32>
    %167 = vector.shape_cast %166 : vector<1x16x64xf32> to vector<16x64xf32>
    %168 = arith.addf %165, %167 : vector<16x64xf32>
    %169 = vector.extract_strided_slice %121 {offsets = [7, 0, 0], sizes = [1, 16, 64], strides = [1, 1, 1]} : vector<8x16x64xf32> to vector<1x16x64xf32>
    %170 = vector.shape_cast %169 : vector<1x16x64xf32> to vector<16x64xf32>
    %171 = arith.mulf %170, %168 : vector<16x64xf32>
    %172 = vector.extract_strided_slice %126 {offsets = [7, 0, 0], sizes = [1, 16, 64], strides = [1, 1, 1]} : vector<8x16x64xf32> to vector<1x16x64xf32>
    %173 = vector.shape_cast %172 : vector<1x16x64xf32> to vector<16x64xf32>
    %174 = arith.addf %171, %173 : vector<16x64xf32>
    %175 = vector.shape_cast %132 : vector<16x64xf32> to vector<1x16x64xf32>
    %176 = vector.shape_cast %138 : vector<16x64xf32> to vector<1x16x64xf32>
    %177 = vector.shape_cast %144 : vector<16x64xf32> to vector<1x16x64xf32>
    %178 = vector.shape_cast %150 : vector<16x64xf32> to vector<1x16x64xf32>
    %179 = vector.shape_cast %156 : vector<16x64xf32> to vector<1x16x64xf32>
    %180 = vector.shape_cast %162 : vector<16x64xf32> to vector<1x16x64xf32>
    %181 = vector.shape_cast %168 : vector<16x64xf32> to vector<1x16x64xf32>
    %182 = vector.shape_cast %174 : vector<16x64xf32> to vector<1x16x64xf32>
    %183 = tpu.concatenate %175, %176, %177, %178, %179, %180, %181, %182 in 0 : vector<1x16x64xf32>, vector<1x16x64xf32>, vector<1x16x64xf32>, vector<1x16x64xf32>, vector<1x16x64xf32>, vector<1x16x64xf32>, vector<1x16x64xf32>, vector<1x16x64xf32> -> vector<8x16x64xf32>
    %184 = vector.shape_cast %115 : vector<8x16xf32> to vector<8x16x1xf32>
    %185 = vector.broadcast %184 : vector<8x16x1xf32> to vector<8x16x64xf32>
    %186 = arith.mulf %185, %183 : vector<8x16x64xf32>
    %cst_39 = arith.constant dense<0.000000e+00> : vector<8x64xf32>
    %187 = vector.multi_reduction <add>, %186, %cst_39 [1] : vector<8x16x64xf32> to vector<8x64xf32>
    %188 = arith.index_cast %109 : i32 to index
    %c0_40 = arith.constant 0 : index
    %189 = vector.load %arg15[%188, %c0_40] : memref<8x64xf32, #tpu.memory_space<vmem>>, vector<8x64xf32>
    tpu.vector_store %arg15[%188, %c0_40], %187 {strides = array<i32>} : memref<8x64xf32, #tpu.memory_space<vmem>>, vector<8x64xf32>,
    %c1_i32_41 = arith.constant 1 : i32
    %c0_42 = arith.constant 0 : index
    %c0_43 = arith.constant 0 : index
    %190 = vector.load %arg15[%c0_42, %c0_43] : memref<8x64xf32, #tpu.memory_space<vmem>>, vector<8x64xf32>
    %c0_44 = arith.constant 0 : index
    %c0_45 = arith.constant 0 : index
    %191 = vector.load %arg11[%c0_44, %c0_45] : memref<1x64xf32, #tpu.memory_space<vmem>>, vector<1x64xf32>
    %192 = vector.broadcast %191 : vector<1x64xf32> to vector<8x64xf32>
    %193 = arith.mulf %77, %192 : vector<8x64xf32>
    %194 = arith.addf %190, %193 : vector<8x64xf32>
    %195 = arith.negf %30 : vector<8x64xf32>
    %196 = math.exp %195 : vector<8x64xf32>
    %cst_46 = arith.constant 1.000000e+00 : f32
    %197 = vector.broadcast %cst_46 : f32 to vector<8x64xf32>
    %198 = arith.addf %197, %196 : vector<8x64xf32>
    %199 = arith.divf %197, %198 : vector<8x64xf32>
    %200 = arith.mulf %30, %199 : vector<8x64xf32>
    %201 = arith.mulf %194, %200 : vector<8x64xf32>
    %c0_47 = arith.constant 0 : index
    %c0_48 = arith.constant 0 : index
    %202 = vector.load %arg12[%c0_47, %c0_48] : memref<64x32xf32, #tpu.memory_space<vmem>>, vector<64x32xf32>
    %cst_49 = arith.constant dense<0.000000e+00> : vector<8x32xf32>
    %203 = tpu.matmul %201, %202, %cst_49 {dimension_numbers = #tpu.dot_dimension_numbers<[1], [0], [0], [1], [0, 0, 1, 1], [], []>} : vector<8x64xf32>, vector<64x32xf32>, vector<8x32xf32> -> vector<8x32xf32>
    %204 = tpu.concatenate %203, %2 in 1 : vector<8x32xf32>, vector<8x32xf32> -> vector<8x64xf32>
    %c0_50 = arith.constant 0 : index
    %c0_51 = arith.constant 0 : index
    %205 = vector.load %arg13[%c0_50, %c0_51] : memref<8x64xf32, #tpu.memory_space<vmem>>, vector<8x64xf32>
    tpu.vector_store %arg13[%c0_50, %c0_51], %204 {strides = array<i32>} : memref<8x64xf32, #tpu.memory_space<vmem>>, vector<8x64xf32>,
    return
  }
  func.func @transform_0(%arg0: i32) -> (i32, i32) {
    %c0_i32 = arith.constant 0 : i32
    %c0_i32_0 = arith.constant 0 : i32
    return %arg0, %c0_i32 : i32, i32
  }
  func.func @transform_1(%arg0: i32) -> (i32, i32) {
    %c0_i32 = arith.constant 0 : i32
    %c0_i32_0 = arith.constant 0 : i32
    return %arg0, %c0_i32 : i32, i32
  }
  func.func @transform_2(%arg0: i32) -> (i32, i32) {
    %c0_i32 = arith.constant 0 : i32
    %c0_i32_0 = arith.constant 0 : i32
    %c0_i32_1 = arith.constant 0 : i32
    return %c0_i32, %c0_i32_0 : i32, i32
  }
  func.func @transform_3(%arg0: i32) -> (i32, i32) {
    %c0_i32 = arith.constant 0 : i32
    %c0_i32_0 = arith.constant 0 : i32
    %c0_i32_1 = arith.constant 0 : i32
    return %c0_i32, %c0_i32_0 : i32, i32
  }
  func.func @transform_4(%arg0: i32) -> (i32, i32) {
    %c0_i32 = arith.constant 0 : i32
    %c0_i32_0 = arith.constant 0 : i32
    %c0_i32_1 = arith.constant 0 : i32
    return %c0_i32, %c0_i32_0 : i32, i32
  }
  func.func @transform_5(%arg0: i32) -> (i32, i32) {
    %c0_i32 = arith.constant 0 : i32
    %c0_i32_0 = arith.constant 0 : i32
    %c0_i32_1 = arith.constant 0 : i32
    return %c0_i32, %c0_i32_0 : i32, i32
  }
  func.func @transform_6(%arg0: i32) -> (i32, i32) {
    %c0_i32 = arith.constant 0 : i32
    %c0_i32_0 = arith.constant 0 : i32
    %c0_i32_1 = arith.constant 0 : i32
    return %c0_i32, %c0_i32_0 : i32, i32
  }
  func.func @transform_7(%arg0: i32) -> (i32, i32) {
    %c0_i32 = arith.constant 0 : i32
    %c0_i32_0 = arith.constant 0 : i32
    %c0_i32_1 = arith.constant 0 : i32
    return %c0_i32, %c0_i32_0 : i32, i32
  }
  func.func @transform_8(%arg0: i32) -> (i32, i32) {
    %c0_i32 = arith.constant 0 : i32
    %c0_i32_0 = arith.constant 0 : i32
    %c0_i32_1 = arith.constant 0 : i32
    return %c0_i32, %c0_i32_0 : i32, i32
  }
  func.func @transform_9(%arg0: i32) -> (i32, i32) {
    %c0_i32 = arith.constant 0 : i32
    %c0_i32_0 = arith.constant 0 : i32
    %c0_i32_1 = arith.constant 0 : i32
    return %c0_i32, %c0_i32_0 : i32, i32
  }
  func.func @transform_10(%arg0: i32) -> (i32, i32) {
    %c0_i32 = arith.constant 0 : i32
    %c0_i32_0 = arith.constant 0 : i32
    %c0_i32_1 = arith.constant 0 : i32
    return %c0_i32, %c0_i32_0 : i32, i32
  }
  func.func @transform_11(%arg0: i32) -> (i32, i32) {
    %c0_i32 = arith.constant 0 : i32
    %c0_i32_0 = arith.constant 0 : i32
    %c0_i32_1 = arith.constant 0 : i32
    return %c0_i32, %c0_i32_0 : i32, i32
  }
  func.func @transform_12(%arg0: i32) -> (i32, i32) {
    %c0_i32 = arith.constant 0 : i32
    %c0_i32_0 = arith.constant 0 : i32
    return %arg0, %c0_i32 : i32, i32
  }
}

</mosaic_0001>

<llo_original>
// kernel: tpu_custom_call.1
$region0: #{tpu_custom_call.1}
  #allocation0 [shape = 'u32[]', space=smem, size = 0x4, offset = 0x4, fixed_abs, tag = 'smem constant byte address 0x4 - core index']
  #allocation1 [shape = 'u32[144,128]{1,0:T(1,128)}', space=vmem, size = 0x12000, scoped, tag = 'internal scratch']
  #allocation2 [shape = 'f32[8,160]{1,0:T(8,128)}', space=vmem, size = 0x2000, scoped, tag = 'scratch operand']
  #allocation3 [shape = 'f32[8,64]{1,0:T(8,128)}', space=vmem, size = 0x1000, scoped, tag = 'scratch operand']
  %s0 = inlined_call_operand.hbm [shape: f32[16,32], index: 0, kind: input, shape index: {}]
  %s1 = inlined_call_operand.hbm [shape: f32[16,32], index: 1, kind: input, shape index: {}]
  %s2 = inlined_call_operand.vmem [shape: f32[1,32], index: 2, kind: input, shape index: {}]
  %s3 = inlined_call_operand.vmem [shape: f32[1,32], index: 3, kind: input, shape index: {}]
  %s4 = inlined_call_operand.vmem [shape: f32[32,128], index: 4, kind: input, shape index: {}]
  %s5 = inlined_call_operand.vmem [shape: f32[4,64], index: 5, kind: input, shape index: {}]
  %s6 = inlined_call_operand.vmem [shape: f32[1,64], index: 6, kind: input, shape index: {}]
  %s7 = inlined_call_operand.vmem [shape: f32[64,96], index: 7, kind: input, shape index: {}]
  %s8 = inlined_call_operand.vmem [shape: f32[1,64], index: 8, kind: input, shape index: {}]
  %s9 = inlined_call_operand.hbm [shape: f32[16,64], index: 9, kind: input, shape index: {}]
  %s10 = inlined_call_operand.vmem [shape: f32[1,64], index: 10, kind: input, shape index: {}]
  %s11 = inlined_call_operand.vmem [shape: f32[64,32], index: 11, kind: input, shape index: {}]
  %s12 = inlined_call_operand.hbm [shape: f32[16,64], index: 12, kind: output, shape index: {}]
  %s13 = sld [smem:[#allocation0]]
  $region93: #{tpu_custom_call.1} parent=0
    _
  %s15 = ssub.s32 1, %s13
  %s16 = scalar_select 0, %s15, %s13
  $region1: #{tpu_custom_call.1} parent=0
    #allocation4 [shape = 'u8[8192]{0}', space=vmem, size = 0x2000, scoped, tag = 'input window, operand 0']
    #allocation5 [shape = 's32[2]{0}', space=sflag, size = 0x8, scoped, tag = 'scoped memory for tpu_custom_call.1']
    #allocation6 [shape = 's32[2]{0}', space=sflag, size = 0x8, scoped, tag = 'scoped memory for tpu_custom_call.1']
    #allocation7 [shape = 'u8[8192]{0}', space=vmem, size = 0x2000, scoped, tag = 'input window, operand 1']
    #allocation8 [shape = 's32[2]{0}', space=sflag, size = 0x8, scoped, tag = 'scoped memory for tpu_custom_call.1']
    #allocation9 [shape = 'u8[8192]{0}', space=vmem, size = 0x2000, scoped, tag = 'input window, operand 9, single buffered']
    #allocation10 [shape = 'u8[8192]{0}', space=vmem, size = 0x2000, scoped, tag = 'output window, operand 0']
    %17 = vsyncpa [#allocation5], 0
    %s18 = scalar_lea.sflag [#allocation5], 1
    %19 = vsyncpa %s18, 0
    %20 = vsyncpa [#allocation8], 0
    %s21 = scalar_lea.sflag [#allocation8], 1
    %22 = vsyncpa %s21, 0
    %23 = vsyncpa [#allocation6], 0
    %s24 = scalar_lea.sflag [#allocation6], 1
    %25 = vsyncpa %s24, 0
    loop: start=0, step=1, limit=4
    $region2: #{tpu_custom_call.1} parent=1 // loop_pre_header
      _
    $region3: #{tpu_custom_call.1} parent=1 // loop_header
      %s27 = sphi 0, %s31
      %p28 = scmp.ge.s32.totalorder %s27, 4
      %s37 = sphi 0, %s39
      %s40 = sphi 0, %s37
      %s41 = sphi 0, %s40
      %s57 = sphi 0, %s41
      %s63 = sphi 0, %s65
      %s66 = sphi 0, %s63
      %s67 = sphi 0, %s66
      %s83 = sphi 0, %s67
      %s87 = sphi 0, %s87
      %s89 = sphi 0, %s87
      %s90 = sphi 0, %s89
      %s104 = sphi 0, %s90
      %s108 = sphi 0, %s108
      %s110 = sphi 0, %s108
      %s111 = sphi 0, %s110
      %s125 = sphi 0, %s111
      %s129 = sphi 0, %s129
      %s131 = sphi 0, %s129
      %s132 = sphi 0, %s131
      %s146 = sphi 0, %s132
      %s150 = sphi 0, %s150
      %s152 = sphi 0, %s150
      %s153 = sphi 0, %s152
      %s167 = sphi 0, %s153
      %s171 = sphi 0, %s171
      %s173 = sphi 0, %s171
      %s174 = sphi 0, %s173
      %s188 = sphi 0, %s174
      %s192 = sphi 0, %s192
      %s194 = sphi 0, %s192
      %s195 = sphi 0, %s194
      %s209 = sphi 0, %s195
      %s213 = sphi 0, %s213
      %s215 = sphi 0, %s213
      %s216 = sphi 0, %s215
      %s230 = sphi 0, %s216
      %s234 = sphi 0, %s234
      %s236 = sphi 0, %s234
      %s237 = sphi 0, %s236
      %s251 = sphi 0, %s237
      %s255 = sphi 0, %s255
      %s257 = sphi 0, %s255
      %s258 = sphi 0, %s257
      %s272 = sphi 0, %s258
      %s276 = sphi 0, %s276
      %s278 = sphi 0, %s276
      %s279 = sphi 0, %s278
      %s293 = sphi 0, %s279
      %s299 = sphi 0, %s301
      %s302 = sphi 0, %s299
      %s303 = sphi 0, %s302
      %s319 = sphi 0, %s303
    $region4: #{tpu_custom_call.1} parent=1 // loop_header_branch
      %30 = sbr.rel (%p28) target = $region8
    $region5: #{tpu_custom_call.1} parent=1 // loop_body
      %s32 = ssub.s32 %s27, 1
      %s33 = ssub.s32 %s27, 2
      %s34 = sadd.s32 %s27, 1
      %s35 = ssub.s32 %s27, %s34
      %p36 = scmp.eq.s32.totalorder %s35, 0
      %s38 = sadd.s32 %s37, 1
      %s39 = scalar_select %p36, %s37, %s38
      %p42 = pneg %p36
      %p43 = scmp.eq.s32.totalorder %s27, 1
      %p44 = por %p42, %p43
      %p45 = scmp.ne.s32.totalorder %s37, %s40
      %p46 = scmp.eq.s32.totalorder %s27, 0
      %p47 = por %p45, %p46
      %p48 = scmp.ne.s32.totalorder %s37, %s40
      %p49 = scmp.eq.s32.totalorder %s32, 1
      %p50 = por %p48, %p49
      %p51 = scmp.ne.s32.totalorder %s40, %s41
      %p52 = scmp.eq.s32.totalorder %s32, 0
      %p53 = por %p51, %p52
      %p54 = scmp.ne.s32.totalorder %s40, %s41
      %p55 = scmp.eq.s32.totalorder %s33, 1
      %p56 = por %p54, %p55
      %p58 = scmp.ne.s32.totalorder %s41, %s57
      %p59 = scmp.eq.s32.totalorder %s33, 0
      %p60 = por %p58, %p59
      %s61 = ssub.s32 %s27, %s34
      %p62 = scmp.eq.s32.totalorder %s61, 0
      %s64 = sadd.s32 %s63, 1
      %s65 = scalar_select %p62, %s63, %s64
      %p68 = pneg %p62
      %p69 = scmp.eq.s32.totalorder %s27, 1
      %p70 = por %p68, %p69
      %p71 = scmp.ne.s32.totalorder %s63, %s66
      %p72 = scmp.eq.s32.totalorder %s27, 0
      %p73 = por %p71, %p72
      %p74 = scmp.ne.s32.totalorder %s63, %s66
      %p75 = scmp.eq.s32.totalorder %s32, 1
      %p76 = por %p74, %p75
      %p77 = scmp.ne.s32.totalorder %s66, %s67
      %p78 = scmp.eq.s32.totalorder %s32, 0
      %p79 = por %p77, %p78
      %p80 = scmp.ne.s32.totalorder %s66, %s67
      %p81 = scmp.eq.s32.totalorder %s33, 1
      %p82 = por %p80, %p81
      %p84 = scmp.ne.s32.totalorder %s67, %s83
      %p85 = scmp.eq.s32.totalorder %s33, 0
      %p86 = por %p84, %p85
      %s88 = sadd.s32 %s87, 1
      %p91 = scmp.eq.s32.totalorder %s27, 1
      %p92 = scmp.ne.s32.totalorder %s87, %s89
      %p93 = scmp.eq.s32.totalorder %s27, 0
      %p94 = por %p92, %p93
      %p95 = scmp.ne.s32.totalorder %s87, %s89
      %p96 = scmp.eq.s32.totalorder %s32, 1
      %p97 = por %p95, %p96
      %p98 = scmp.ne.s32.totalorder %s89, %s90
      %p99 = scmp.eq.s32.totalorder %s32, 0
      %p100 = por %p98, %p99
      %p101 = scmp.ne.s32.totalorder %s89, %s90
      %p102 = scmp.eq.s32.totalorder %s33, 1
      %p103 = por %p101, %p102
      %p105 = scmp.ne.s32.totalorder %s90, %s104
      %p106 = scmp.eq.s32.totalorder %s33, 0
      %p107 = por %p105, %p106
      %s109 = sadd.s32 %s108, 1
      %p112 = scmp.eq.s32.totalorder %s27, 1
      %p113 = scmp.ne.s32.totalorder %s108, %s110
      %p114 = scmp.eq.s32.totalorder %s27, 0
      %p115 = por %p113, %p114
      %p116 = scmp.ne.s32.totalorder %s108, %s110
      %p117 = scmp.eq.s32.totalorder %s32, 1
      %p118 = por %p116, %p117
      %p119 = scmp.ne.s32.totalorder %s110, %s111
      %p120 = scmp.eq.s32.totalorder %s32, 0
      %p121 = por %p119, %p120
      %p122 = scmp.ne.s32.totalorder %s110, %s111
      %p123 = scmp.eq.s32.totalorder %s33, 1
      %p124 = por %p122, %p123
      %p126 = scmp.ne.s32.totalorder %s111, %s125
      %p127 = scmp.eq.s32.totalorder %s33, 0
      %p128 = por %p126, %p127
      %s130 = sadd.s32 %s129, 1
      %p133 = scmp.eq.s32.totalorder %s27, 1
      %p134 = scmp.ne.s32.totalorder %s129, %s131
      %p135 = scmp.eq.s32.totalorder %s27, 0
      %p136 = por %p134, %p135
      %p137 = scmp.ne.s32.totalorder %s129, %s131
      %p138 = scmp.eq.s32.totalorder %s32, 1
      %p139 = por %p137, %p138
      %p140 = scmp.ne.s32.totalorder %s131, %s132
      %p141 = scmp.eq.s32.totalorder %s32, 0
      %p142 = por %p140, %p141
      %p143 = scmp.ne.s32.totalorder %s131, %s132
      %p144 = scmp.eq.s32.totalorder %s33, 1
      %p145 = por %p143, %p144
      %p147 = scmp.ne.s32.totalorder %s132, %s146
      %p148 = scmp.eq.s32.totalorder %s33, 0
      %p149 = por %p147, %p148
      %s151 = sadd.s32 %s150, 1
      %p154 = scmp.eq.s32.totalorder %s27, 1
      %p155 = scmp.ne.s32.totalorder %s150, %s152
      %p156 = scmp.eq.s32.totalorder %s27, 0
      %p157 = por %p155, %p156
      %p158 = scmp.ne.s32.totalorder %s150, %s152
      %p159 = scmp.eq.s32.totalorder %s32, 1
      %p160 = por %p158, %p159
      %p161 = scmp.ne.s32.totalorder %s152, %s153
      %p162 = scmp.eq.s32.totalorder %s32, 0
      %p163 = por %p161, %p162
      %p164 = scmp.ne.s32.totalorder %s152, %s153
      %p165 = scmp.eq.s32.totalorder %s33, 1
      %p166 = por %p164, %p165
      %p168 = scmp.ne.s32.totalorder %s153, %s167
      %p169 = scmp.eq.s32.totalorder %s33, 0
      %p170 = por %p168, %p169
      %s172 = sadd.s32 %s171, 1
      %p175 = scmp.eq.s32.totalorder %s27, 1
      %p176 = scmp.ne.s32.totalorder %s171, %s173
      %p177 = scmp.eq.s32.totalorder %s27, 0
      %p178 = por %p176, %p177
      %p179 = scmp.ne.s32.totalorder %s171, %s173
      %p180 = scmp.eq.s32.totalorder %s32, 1
      %p181 = por %p179, %p180
      %p182 = scmp.ne.s32.totalorder %s173, %s174
      %p183 = scmp.eq.s32.totalorder %s32, 0
      %p184 = por %p182, %p183
      %p185 = scmp.ne.s32.totalorder %s173, %s174
      %p186 = scmp.eq.s32.totalorder %s33, 1
      %p187 = por %p185, %p186
      %p189 = scmp.ne.s32.totalorder %s174, %s188
      %p190 = scmp.eq.s32.totalorder %s33, 0
      %p191 = por %p189, %p190
      %s193 = sadd.s32 %s192, 1
      %p196 = scmp.eq.s32.totalorder %s27, 1
      %p197 = scmp.ne.s32.totalorder %s192, %s194
      %p198 = scmp.eq.s32.totalorder %s27, 0
      %p199 = por %p197, %p198
      %p200 = scmp.ne.s32.totalorder %s192, %s194
      %p201 = scmp.eq.s32.totalorder %s32, 1
      %p202 = por %p200, %p201
      %p203 = scmp.ne.s32.totalorder %s194, %s195
      %p204 = scmp.eq.s32.totalorder %s32, 0
      %p205 = por %p203, %p204
      %p206 = scmp.ne.s32.totalorder %s194, %s195
      %p207 = scmp.eq.s32.totalorder %s33, 1
      %p208 = por %p206, %p207
      %p210 = scmp.ne.s32.totalorder %s195, %s209
      %p211 = scmp.eq.s32.totalorder %s33, 0
      %p212 = por %p210, %p211
      %s214 = sadd.s32 %s213, 1
      %p217 = scmp.eq.s32.totalorder %s27, 1
      %p218 = scmp.ne.s32.totalorder %s213, %s215
      %p219 = scmp.eq.s32.totalorder %s27, 0
      %p220 = por %p218, %p219
      %p221 = scmp.ne.s32.totalorder %s213, %s215
      %p222 = scmp.eq.s32.totalorder %s32, 1
      %p223 = por %p221, %p222
      %p224 = scmp.ne.s32.totalorder %s215, %s216
      %p225 = scmp.eq.s32.totalorder %s32, 0
      %p226 = por %p224, %p225
      %p227 = scmp.ne.s32.totalorder %s215, %s216
      %p228 = scmp.eq.s32.totalorder %s33, 1
      %p229 = por %p227, %p228
      %p231 = scmp.ne.s32.totalorder %s216, %s230
      %p232 = scmp.eq.s32.totalorder %s33, 0
      %p233 = por %p231, %p232
      %s235 = sadd.s32 %s234, 1
      %p238 = scmp.eq.s32.totalorder %s27, 1
      %p239 = scmp.ne.s32.totalorder %s234, %s236
      %p240 = scmp.eq.s32.totalorder %s27, 0
      %p241 = por %p239, %p240
      %p242 = scmp.ne.s32.totalorder %s234, %s236
      %p243 = scmp.eq.s32.totalorder %s32, 1
      %p244 = por %p242, %p243
      %p245 = scmp.ne.s32.totalorder %s236, %s237
      %p246 = scmp.eq.s32.totalorder %s32, 0
      %p247 = por %p245, %p246
      %p248 = scmp.ne.s32.totalorder %s236, %s237
      %p249 = scmp.eq.s32.totalorder %s33, 1
      %p250 = por %p248, %p249
      %p252 = scmp.ne.s32.totalorder %s237, %s251
      %p253 = scmp.eq.s32.totalorder %s33, 0
      %p254 = por %p252, %p253
      %s256 = sadd.s32 %s255, 1
      %p259 = scmp.eq.s32.totalorder %s27, 1
      %p260 = scmp.ne.s32.totalorder %s255, %s257
      %p261 = scmp.eq.s32.totalorder %s27, 0
      %p262 = por %p260, %p261
      %p263 = scmp.ne.s32.totalorder %s255, %s257
      %p264 = scmp.eq.s32.totalorder %s32, 1
      %p265 = por %p263, %p264
      %p266 = scmp.ne.s32.totalorder %s257, %s258
      %p267 = scmp.eq.s32.totalorder %s32, 0
      %p268 = por %p266, %p267
      %p269 = scmp.ne.s32.totalorder %s257, %s258
      %p270 = scmp.eq.s32.totalorder %s33, 1
      %p271 = por %p269, %p270
      %p273 = scmp.ne.s32.totalorder %s258, %s272
      %p274 = scmp.eq.s32.totalorder %s33, 0
      %p275 = por %p273, %p274
      %s277 = sadd.s32 %s276, 1
      %p280 = scmp.eq.s32.totalorder %s27, 1
      %p281 = scmp.ne.s32.totalorder %s276, %s278
      %p282 = scmp.eq.s32.totalorder %s27, 0
      %p283 = por %p281, %p282
      %p284 = scmp.ne.s32.totalorder %s276, %s278
      %p285 = scmp.eq.s32.totalorder %s32, 1
      %p286 = por %p284, %p285
      %p287 = scmp.ne.s32.totalorder %s278, %s279
      %p288 = scmp.eq.s32.totalorder %s32, 0
      %p289 = por %p287, %p288
      %p290 = scmp.ne.s32.totalorder %s278, %s279
      %p291 = scmp.eq.s32.totalorder %s33, 1
      %p292 = por %p290, %p291
      %p294 = scmp.ne.s32.totalorder %s279, %s293
      %p295 = scmp.eq.s32.totalorder %s33, 0
      %p296 = por %p294, %p295
      %s297 = ssub.s32 %s27, %s34
      %p298 = scmp.eq.s32.totalorder %s297, 0
      %s300 = sadd.s32 %s299, 1
      %s301 = scalar_select %p298, %s299, %s300
      %p304 = pneg %p298
      %p305 = scmp.eq.s32.totalorder %s27, 1
      %p306 = por %p304, %p305
      %p307 = scmp.ne.s32.totalorder %s299, %s302
      %p308 = scmp.eq.s32.totalorder %s27, 0
      %p309 = por %p307, %p308
      %p310 = scmp.ne.s32.totalorder %s299, %s302
      %p311 = scmp.eq.s32.totalorder %s32, 1
      %p312 = por %p310, %p311
      %p313 = scmp.ne.s32.totalorder %s302, %s303
      %p314 = scmp.eq.s32.totalorder %s32, 0
      %p315 = por %p313, %p314
      %p316 = scmp.ne.s32.totalorder %s302, %s303
      %p317 = scmp.eq.s32.totalorder %s33, 1
      %p318 = por %p316, %p317
      %p320 = scmp.ne.s32.totalorder %s303, %s319
      %p321 = scmp.eq.s32.totalorder %s33, 0
      %p322 = por %p320, %p321
      %p323 = scmp.le.s32.totalorder 1, %s27
      %p324 = scmp.lt.s32.totalorder %s27, 3
      %p325 = pnand %p323, %p324
      %p326 = pneg %p325
      // Predicated region
      $region9: #{tpu_custom_call.1} parent=5 // pred_check
        _
      $region10: #{tpu_custom_call.1} parent=5 // pred_check_branch
        %328 = sbr.rel (%p325) target = $region12
      $region11: #{tpu_custom_call.1} parent=5 // pred_region
        %s329 = ssub.s32 %s27, 1
        // Predicated region
        $region13: #{tpu_custom_call.1} parent=11 // pred_check
          %p330 = pneg %p100
        $region14: #{tpu_custom_call.1} parent=11 // pred_check_branch
          %332 = sbr.rel (%p330) target = $region16
        $region15: #{tpu_custom_call.1} parent=11 // pred_region
          _
        $region16: #{tpu_custom_call.1} parent=11 // pred_fallthru
          _
        // Predicated region
        $region17: #{tpu_custom_call.1} parent=11 // pred_check
          %p333 = pneg %p121
        $region18: #{tpu_custom_call.1} parent=11 // pred_check_branch
          %335 = sbr.rel (%p333) target = $region20
        $region19: #{tpu_custom_call.1} parent=11 // pred_region
          _
        $region20: #{tpu_custom_call.1} parent=11 // pred_fallthru
          _
        // Predicated region
        $region21: #{tpu_custom_call.1} parent=11 // pred_check
          %p336 = pneg %p142
        $region22: #{tpu_custom_call.1} parent=11 // pred_check_branch
          %338 = sbr.rel (%p336) target = $region24
        $region23: #{tpu_custom_call.1} parent=11 // pred_region
          _
        $region24: #{tpu_custom_call.1} parent=11 // pred_fallthru
          _
        // Predicated region
        $region25: #{tpu_custom_call.1} parent=11 // pred_check
          %p339 = pneg %p163
        $region26: #{tpu_custom_call.1} parent=11 // pred_check_branch
          %341 = sbr.rel (%p339) target = $region28
        $region27: #{tpu_custom_call.1} parent=11 // pred_region
          _
        $region28: #{tpu_custom_call.1} parent=11 // pred_fallthru
          _
        // Predicated region
        $region29: #{tpu_custom_call.1} parent=11 // pred_check
          %p342 = pneg %p184
        $region30: #{tpu_custom_call.1} parent=11 // pred_check_branch
          %344 = sbr.rel (%p342) target = $region32
        $region31: #{tpu_custom_call.1} parent=11 // pred_region
          _
        $region32: #{tpu_custom_call.1} parent=11 // pred_fallthru
          _
        // Predicated region
        $region33: #{tpu_custom_call.1} parent=11 // pred_check
          %p345 = pneg %p205
        $region34: #{tpu_custom_call.1} parent=11 // pred_check_branch
          %347 = sbr.rel (%p345) target = $region36
        $region35: #{tpu_custom_call.1} parent=11 // pred_region
          _
        $region36: #{tpu_custom_call.1} parent=11 // pred_fallthru
          _
        // Predicated region
        $region37: #{tpu_custom_call.1} parent=11 // pred_check
          %p348 = pneg %p226
        $region38: #{tpu_custom_call.1} parent=11 // pred_check_branch
          %350 = sbr.rel (%p348) target = $region40
        $region39: #{tpu_custom_call.1} parent=11 // pred_region
          _
        $region40: #{tpu_custom_call.1} parent=11 // pred_fallthru
          _
        // Predicated region
        $region41: #{tpu_custom_call.1} parent=11 // pred_check
          %p351 = pneg %p247
        $region42: #{tpu_custom_call.1} parent=11 // pred_check_branch
          %353 = sbr.rel (%p351) target = $region44
        $region43: #{tpu_custom_call.1} parent=11 // pred_region
          %s355 = ssub.s32 256, 256
          %356 = vsyncadd [#allocation8], %s355
          %s357 = sshll.u32 [#allocation9], 4
          %s358 = int_to_ptr.vmem [resolvable:$true] %s357
          %363 = dma.hbm_to_vmem [thread:$0]  %s9, 256, %s358, [#allocation8], 128, 128, 8
        $region44: #{tpu_custom_call.1} parent=11 // pred_fallthru
          _
        // Predicated region
        $region45: #{tpu_custom_call.1} parent=11 // pred_check
          %p364 = pneg %p268
        $region46: #{tpu_custom_call.1} parent=11 // pred_check_branch
          %366 = sbr.rel (%p364) target = $region48
        $region47: #{tpu_custom_call.1} parent=11 // pred_region
          _
        $region48: #{tpu_custom_call.1} parent=11 // pred_fallthru
          _
        // Predicated region
        $region49: #{tpu_custom_call.1} parent=11 // pred_check
          %p367 = pneg %p289
        $region50: #{tpu_custom_call.1} parent=11 // pred_check_branch
          %369 = sbr.rel (%p367) target = $region52
        $region51: #{tpu_custom_call.1} parent=11 // pred_region
          _
        $region52: #{tpu_custom_call.1} parent=11 // pred_fallthru
          _
      $region12: #{tpu_custom_call.1} parent=5 // pred_fallthru
        _
      %p370 = scmp.lt.s32.totalorder %s27, 2
      // Predicated region
      $region53: #{tpu_custom_call.1} parent=5 // pred_check
        %p371 = pneg %p370
      $region54: #{tpu_custom_call.1} parent=5 // pred_check_branch
        %373 = sbr.rel (%p371) target = $region56
      $region55: #{tpu_custom_call.1} parent=5 // pred_region
        // Predicated region
        $region57: #{tpu_custom_call.1} parent=55 // pred_check
          %p374 = pneg %p47
        $region58: #{tpu_custom_call.1} parent=55 // pred_check_branch
          %376 = sbr.rel (%p374) target = $region60
        $region59: #{tpu_custom_call.1} parent=55 // pred_region
          %s377 = sand.u32 %s37, 1
          %s378 = scalar_lea.sflag [#allocation5], %s377
          %s379 = sand.u32 %s37, 1
          %s380 = smul.addr %s379, 8
          %s381 = scalar_lea.vmem [#allocation4], %s380
          %s383 = ssub.s32 128, 128
          %384 = vsyncadd %s378, %s383
          %s385 = smul.addr %s27, 128
          %s386 = scalar_lea.hbm %s0, %s385
          %s388 = sshll.u32 %s381, 4
          %s389 = int_to_ptr.vmem [resolvable:$true] %s388
          %391 = dma.hbm_to_vmem [thread:$0]  %s386, 128, %s389, %s378
        $region60: #{tpu_custom_call.1} parent=55 // pred_fallthru
          _
        // Predicated region
        $region61: #{tpu_custom_call.1} parent=55 // pred_check
          %p392 = pneg %p73
        $region62: #{tpu_custom_call.1} parent=55 // pred_check_branch
          %394 = sbr.rel (%p392) target = $region64
        $region63: #{tpu_custom_call.1} parent=55 // pred_region
          %s395 = sand.u32 %s27, 1
          %s396 = scalar_lea.sflag [#allocation8], %s395
          %s397 = sand.u32 %s63, 1
          %s398 = smul.addr %s397, 8
          %s399 = scalar_lea.vmem [#allocation7], %s398
          %s401 = ssub.s32 128, 128
          %402 = vsyncadd %s396, %s401
          %s403 = smul.addr %s27, 128
          %s404 = scalar_lea.hbm %s1, %s403
          %s406 = sshll.u32 %s399, 4
          %s407 = int_to_ptr.vmem [resolvable:$true] %s406
          %409 = dma.hbm_to_vmem [thread:$0]  %s404, 128, %s407, %s396
        $region64: #{tpu_custom_call.1} parent=55 // pred_fallthru
          _
      $region56: #{tpu_custom_call.1} parent=5 // pred_fallthru
        _
      %p410 = scmp.le.s32.totalorder 1, %s27
      %p411 = scmp.lt.s32.totalorder %s27, 3
      %p412 = pnand %p410, %p411
      %p413 = pneg %p412
      // Predicated region
      $region65: #{tpu_custom_call.1} parent=5 // pred_check
        _
      $region66: #{tpu_custom_call.1} parent=5 // pred_check_branch
        %415 = sbr.rel (%p412) target = $region68
      $region67: #{tpu_custom_call.1} parent=5 // pred_region
        %s416 = ssub.s32 %s27, 1
        %s417 = sand.u32 %s40, 1
        %s418 = scalar_lea.sflag [#allocation5], %s417
        %s419 = sand.u32 %s40, 1
        %s420 = smul.addr %s419, 8
        %s421 = scalar_lea.vmem [#allocation4], %s420
        // Predicated region
        $region69: #{tpu_custom_call.1} parent=67 // pred_check
          %p422 = pneg %p53
        $region70: #{tpu_custom_call.1} parent=67 // pred_check_branch
          %424 = sbr.rel (%p422) target = $region72
        $region71: #{tpu_custom_call.1} parent=67 // pred_region
          %425 = dma.done %s418, 128
        $region72: #{tpu_custom_call.1} parent=67 // pred_fallthru
          _
        %s426 = sand.u32 %s32, 1
        %s427 = scalar_lea.sflag [#allocation8], %s426
        %s428 = sand.u32 %s66, 1
        %s429 = smul.addr %s428, 8
        %s430 = scalar_lea.vmem [#allocation7], %s429
        // Predicated region
        $region73: #{tpu_custom_call.1} parent=67 // pred_check
          %p431 = pneg %p79
        $region74: #{tpu_custom_call.1} parent=67 // pred_check_branch
          %433 = sbr.rel (%p431) target = $region76
        $region75: #{tpu_custom_call.1} parent=67 // pred_region
          %434 = dma.done %s427, 128
        $region76: #{tpu_custom_call.1} parent=67 // pred_fallthru
          _
        // Predicated region
        $region77: #{tpu_custom_call.1} parent=67 // pred_check
          %p435 = pneg %p247
        $region78: #{tpu_custom_call.1} parent=67 // pred_check_branch
          %437 = sbr.rel (%p435) target = $region80
        $region79: #{tpu_custom_call.1} parent=67 // pred_region
          %438 = dma.done [#allocation8], 256
        $region80: #{tpu_custom_call.1} parent=67 // pred_fallthru
          _
        %s439 = sand.u32 %s40, 1
        %s440 = scalar_lea.sflag [#allocation5], %s439
        %s441 = sand.u32 %s40, 1
        %s442 = smul.addr %s441, 8
        %s443 = scalar_lea.vmem [#allocation4], %s442
        %p444 = pneg %p53
        %p445 = pneg %p50
        %s446 = sand.u32 %s32, 1
        %s447 = scalar_lea.sflag [#allocation8], %s446
        %s448 = sand.u32 %s66, 1
        %s449 = smul.addr %s448, 8
        %s450 = scalar_lea.vmem [#allocation7], %s449
        %p451 = pneg %p79
        %p452 = pneg %p76
        %p453 = pneg %p100
        %p454 = pneg %p97
        %p455 = pneg %p121
        %p456 = pneg %p118
        %p457 = pneg %p142
        %p458 = pneg %p139
        %p459 = pneg %p163
        %p460 = pneg %p160
        %p461 = pneg %p184
        %p462 = pneg %p181
        %p463 = pneg %p205
        %p464 = pneg %p202
        %p465 = pneg %p226
        %p466 = pneg %p223
        %p467 = pneg %p247
        %p468 = pneg %p244
        %p469 = pneg %p268
        %p470 = pneg %p265
        %p471 = pneg %p289
        %p472 = pneg %p286
        %p473 = pneg %p315
        %p474 = pneg %p312
        %s475 = sand.u32 %s302, 1
        %s476 = scalar_lea.sflag [#allocation6], %s475
        %s477 = sand.u32 %s302, 1
        %s478 = smul.addr %s477, 8
        %s479 = scalar_lea.vmem [#allocation10], %s478
        %v480 = vld [vmem:[%s421] sm:$0xff]
        %v481 = vld [vmem:[%s430] sm:$0xff]
        %v482 = vadd.f32 %v480, %v481
        %vm483 = vcmask 261120
        %v484 = vsel %vm483, %v482, 0.0
        %485 = vadd.xlane.f32.xlu0 %v484
        %v486 = vpop.xlane.xlu0 %485
        %v487 = vrcp.pop 32.0
        %v488 = vmul.f32 %v486, %v487
        %v489 = vsub.f32 %v482, %v488
        %v490 = vmul.f32 %v489, %v489
        %v491 = vsel %vm483, %v490, 0.0
        %492 = vadd.xlane.f32.xlu0 %v491
        %v493 = vpop.xlane.xlu0 %492
        %v494 = vmul.f32 %v493, %v487
        %v495 = vadd.f32 %v494, 1e-05
        %v496 = vrsqrt.pop %v495
        %v497 = vmul.f32 %v489, %v496
        %v498 = vld [vmem:[%s2] sm:$0x1]
        %v500 = vlaneseq
        %v501 = vshrl.u32 %v500, 7
        %v502 = vsub.s32 0, %v501
        %v503 = vrot.slane %v498, %v502
        %v505 = vmul.f32 %v497, %v503
        %v506 = vld [vmem:[%s3] sm:$0x1]
        %v508 = vlaneseq
        %v509 = vshrl.u32 %v508, 7
        %v510 = vsub.s32 0, %v509
        %v511 = vrot.slane %v506, %v510
        %v513 = vadd.f32 %v505, %v511
        %v514 = vld [vmem:[%s4] sm:$0xff]
        %v515 = vld [vmem:[%s4 + $0x8] sm:$0xff]
        %v516 = vld [vmem:[%s4 + $0x10] sm:$0xff]
        %v517 = vld [vmem:[%s4 + $0x18] sm:$0xff]
        %v519 = vsel %vm483, %v513, 0
        %521 = vmatprep.subr.mxu0 0.0
        %522 = vmatpush1.msra.mxu0 %v514
        %523 = vmatprep.subr.mxu0 0.0
        %524 = vmatpush1.msra.mxu0 %v515
        %525 = vmatprep.subr.mxu0 0.0
        %526 = vmatpush1.msra.mxu0 %v516
        %527 = vmatprep.subr.mxu0 0.0
        %528 = vmatpush1.msra.mxu0 %v517
        %529 = vmatprep.subr.mxu0 0.0
        %530 = vmatpush1.msra.mxu0 0.0
        %531 = vmatprep.subr.mxu0 0.0
        %532 = vmatpush1.msra.mxu0 0.0
        %533 = vmatprep.subr.mxu0 0.0
        %534 = vmatpush1.msra.mxu0 0.0
        %535 = vmatprep.subr.mxu0 0.0
        %536 = vmatpush1.msra.mxu0 0.0
        %537 = vmatprep.subr.mxu0 0.0
        %538 = vmatpush1.msra.mxu0 0.0
        %539 = vmatprep.subr.mxu0 0.0
        %540 = vmatpush1.msra.mxu0 0.0
        %541 = vmatprep.subr.mxu0 0.0
        %542 = vmatpush1.msra.mxu0 0.0
        %543 = vmatprep.subr.mxu0 0.0
        %544 = vmatpush1.msra.mxu0 0.0
        %545 = vmatprep.subr.mxu0 0.0
        %546 = vmatpush1.msra.mxu0 0.0
        %547 = vmatprep.subr.mxu0 0.0
        %548 = vmatpush1.msra.mxu0 0.0
        %549 = vmatprep.subr.mxu0 0.0
        %550 = vmatpush1.msra.mxu0 0.0
        %551 = vmatprep.subr.mxu0 0.0
        %552 = vmatpush1.msra.mxu0 0.0
        %553 = vmatprep.subr.mxu0 0.0
        %554 = vmatpush1.msra.mxu0 0.0
        %555 = vmatprep.subr.mxu0 0.0
        %556 = vmatpush1.msra.mxu0 0.0
        %557 = vmatprep.subr.mxu0 0.0
        %558 = vmatpush1.msra.mxu0 0.0
        %559 = vmatprep.subr.mxu0 0.0
        %560 = vmatpush1.msra.mxu0 0.0
        %561 = vmatprep.subr.mxu0 0.0
        %562 = vmatpush1.msra.mxu0 0.0
        %563 = vmatprep.subr.mxu0 0.0
        %564 = vmatpush1.msra.mxu0 0.0
        %565 = vmatprep.subr.mxu0 0.0
        %566 = vmatpush1.msra.mxu0 0.0
        %567 = vmatprep.subr.mxu0 0.0
        %568 = vmatpush1.msra.mxu0 0.0
        %569 = vmatprep.subr.mxu0 0.0
        %570 = vmatpush1.msra.mxu0 0.0
        %571 = vmatprep.subr.mxu0 0.0
        %572 = vmatpush1.msra.mxu0 0.0
        %573 = vmatprep.subr.mxu0 0.0
        %574 = vmatpush1.msra.mxu0 0.0
        %575 = vmatprep.subr.mxu0 0.0
        %576 = vmatpush1.msra.mxu0 0.0
        %577 = vmatprep.subr.mxu0 0.0
        %578 = vmatpush1.msra.mxu0 0.0
        %579 = vmatprep.subr.mxu0 0.0
        %580 = vmatpush1.msra.mxu0 0.0
        %581 = vmatprep.subr.mxu0 0.0
        %582 = vmatpush1.msra.mxu0 0.0
        %583 = vmatprep.subr.mxu0 0.0
        %584 = vmatpush1.msra.mxu0 0.0
        %585 = vmatprep.mubr.f32.mxu0 0.0
        %586 = vmatmul.mubr.f32.gmra.mrb[0].mxu0 %v519
        %v587 = vpop.f32.mrb[0].mxu0
        %v588 = vadd.f32 0.0, %v587
        %v589 = vpop.f32.mrb[0].mxu0
        %590 = vdwg.mxu0
        %v591 = vlaneseq
        %v592 = vshrl.u32 %v591, 7
        %v593 = vld [vmem:[%s5] sm:$0xf]
        %v594 = vlaneseq
        %v595 = vshrl.u32 %v594, 7
        %v596 = vsub.s32 3, %v595
        %v597 = vrot.slane %v593, %v596
        %v598 = vmul.f32 %v588, %v597
        %vm599 = vcmp.ge.s32.totalorder %v592, 3
        %v600 = vrot.slane %v588, 5
        %v601 = vsel %vm599, 1, 0
        %vm602 = vcmp.eq.s32.totalorder %v601, 1
        %v603 = vsel %vm602, %v600, 0.0
        %v604 = vlaneseq
        %v605 = vshrl.u32 %v604, 7
        %v606 = vsub.s32 0, %v605
        %v607 = vrot.slane %v593, %v606
        %v608 = vmul.f32 %v603, %v607
        %v609 = vadd.f32 %v598, %v608
        %vm610 = vcmp.ge.s32.totalorder %v592, 2
        %v611 = vrot.slane %v588, 6
        %v612 = vsel %vm610, 1, 0
        %vm613 = vcmp.eq.s32.totalorder %v612, 1
        %v614 = vsel %vm613, %v611, 0.0
        %v615 = vlaneseq
        %v616 = vshrl.u32 %v615, 7
        %v617 = vsub.s32 1, %v616
        %v618 = vrot.slane %v593, %v617
        %v619 = vmul.f32 %v614, %v618
        %v620 = vadd.f32 %v609, %v619
        %vm621 = vcmp.ge.s32.totalorder %v592, 1
        %v622 = vrot.slane %v588, 7
        %v623 = vsel %vm621, 1, 0
        %vm624 = vcmp.eq.s32.totalorder %v623, 1
        %v625 = vsel %vm624, %v622, 0.0
        %v626 = vlaneseq
        %v627 = vshrl.u32 %v626, 7
        %v628 = vsub.s32 2, %v627
        %v629 = vrot.slane %v593, %v628
        %v630 = vmul.f32 %v625, %v629
        %v631 = vadd.f32 %v620, %v630
        %v632 = vld [vmem:[%s6] sm:$0x1]
        %v634 = vlaneseq
        %v635 = vshrl.u32 %v634, 7
        %v636 = vsub.s32 0, %v635
        %v637 = vrot.slane %v632, %v636
        %v639 = vadd.f32 %v631, %v637
        %v640 = vxor.u32 %v639, 2147483648
        %v641 = vmul.f32 %v640, 1.442695
        %v642 = vpow.pop %v641
        %v643 = vadd.f32 %v642, 1.0
        %v644 = vrcp.pop %v643
        %v645 = vmul.f32 1.0, %v644
        %v646 = vmul.f32 %v639, %v645
        %v647 = vld [vmem:[%s7] sm:$0xff]
        %v648 = vld [vmem:[%s7 + $0x8] sm:$0xff]
        %v649 = vld [vmem:[%s7 + $0x10] sm:$0xff]
        %v650 = vld [vmem:[%s7 + $0x18] sm:$0xff]
        %v651 = vld [vmem:[%s7 + $0x20] sm:$0xff]
        %v652 = vld [vmem:[%s7 + $0x28] sm:$0xff]
        %v653 = vld [vmem:[%s7 + $0x30] sm:$0xff]
        %v654 = vld [vmem:[%s7 + $0x38] sm:$0xff]
        %vm655 = vcmask 523264
        %v657 = vsel %vm655, %v646, 0
        %659 = vmatprep.subr.mxu0 0.0
        %660 = vmatpush1.msra.mxu0 %v647
        %661 = vmatprep.subr.mxu0 0.0
        %662 = vmatpush1.msra.mxu0 %v648
        %663 = vmatprep.subr.mxu0 0.0
        %664 = vmatpush1.msra.mxu0 %v649
        %665 = vmatprep.subr.mxu0 0.0
        %666 = vmatpush1.msra.mxu0 %v650
        %667 = vmatprep.subr.mxu0 0.0
        %668 = vmatpush1.msra.mxu0 %v651
        %669 = vmatprep.subr.mxu0 0.0
        %670 = vmatpush1.msra.mxu0 %v652
        %671 = vmatprep.subr.mxu0 0.0
        %672 = vmatpush1.msra.mxu0 %v653
        %673 = vmatprep.subr.mxu0 0.0
        %674 = vmatpush1.msra.mxu0 %v654
        %675 = vmatprep.subr.mxu0 0.0
        %676 = vmatpush1.msra.mxu0 0.0
        %677 = vmatprep.subr.mxu0 0.0
        %678 = vmatpush1.msra.mxu0 0.0
        %679 = vmatprep.subr.mxu0 0.0
        %680 = vmatpush1.msra.mxu0 0.0
        %681 = vmatprep.subr.mxu0 0.0
        %682 = vmatpush1.msra.mxu0 0.0
        %683 = vmatprep.subr.mxu0 0.0
        %684 = vmatpush1.msra.mxu0 0.0
        %685 = vmatprep.subr.mxu0 0.0
        %686 = vmatpush1.msra.mxu0 0.0
        %687 = vmatprep.subr.mxu0 0.0
        %688 = vmatpush1.msra.mxu0 0.0
        %689 = vmatprep.subr.mxu0 0.0
        %690 = vmatpush1.msra.mxu0 0.0
        %691 = vmatprep.subr.mxu0 0.0
        %692 = vmatpush1.msra.mxu0 0.0
        %693 = vmatprep.subr.mxu0 0.0
        %694 = vmatpush1.msra.mxu0 0.0
        %695 = vmatprep.subr.mxu0 0.0
        %696 = vmatpush1.msra.mxu0 0.0
        %697 = vmatprep.subr.mxu0 0.0
        %698 = vmatpush1.msra.mxu0 0.0
        %699 = vmatprep.subr.mxu0 0.0
        %700 = vmatpush1.msra.mxu0 0.0
        %701 = vmatprep.subr.mxu0 0.0
        %702 = vmatpush1.msra.mxu0 0.0
        %703 = vmatprep.subr.mxu0 0.0
        %704 = vmatpush1.msra.mxu0 0.0
        %705 = vmatprep.subr.mxu0 0.0
        %706 = vmatpush1.msra.mxu0 0.0
        %707 = vmatprep.subr.mxu0 0.0
        %708 = vmatpush1.msra.mxu0 0.0
        %709 = vmatprep.subr.mxu0 0.0
        %710 = vmatpush1.msra.mxu0 0.0
        %711 = vmatprep.subr.mxu0 0.0
        %712 = vmatpush1.msra.mxu0 0.0
        %713 = vmatprep.subr.mxu0 0.0
        %714 = vmatpush1.msra.mxu0 0.0
        %715 = vmatprep.subr.mxu0 0.0
        %716 = vmatpush1.msra.mxu0 0.0
        %717 = vmatprep.subr.mxu0 0.0
        %718 = vmatpush1.msra.mxu0 0.0
        %719 = vmatprep.subr.mxu0 0.0
        %720 = vmatpush1.msra.mxu0 0.0
        %721 = vmatprep.subr.mxu0 0.0
        %722 = vmatpush1.msra.mxu0 0.0
        %723 = vmatprep.mubr.f32.mxu0 0.0
        %724 = vmatmul.mubr.f32.gmra.mrb[0].mxu0 %v657
        %v725 = vpop.f32.mrb[0].mxu0
        %v726 = vadd.f32 0.0, %v725
        %v727 = vpop.f32.mrb[0].mxu0
        %728 = vdwg.mxu0
        %v729 = vld [vmem:[%s8] sm:$0x1]
        %v731 = vlaneseq
        %v732 = vshrl.u32 %v731, 7
        %v733 = vsub.s32 0, %v732
        %v734 = vrot.slane %v729, %v733
        %v736 = vadd.f32 %v726, %v734
        %v737 = vmax.f32 %v736, 0.0
        %vm738 = vcmp.ne.f32.partialorder %v736, %v736
        %v739 = vadd.f32 %v736, 0.0
        %v740 = vand.u32 2147483647, %v736
        %v741 = vsub.f32 0.0, %v740
        %v742 = vmul.f32 %v741, 1.442695
        %v743 = vpow.pop %v742
        %v744 = vadd.f32 %v743, 1.0
        %v745 = vlog2.pop %v744
        %v746 = vmul.f32 %v745, 0.6931472
        %v747 = vmul.f32 -0.5, %v743
        %v748 = vadd.f32 %v747, 1.0
        %v749 = vmul.f32 %v748, %v743
        %v750 = vand.u32 2147483647, %v743
        %vm751 = vcmp.lt.f32.partialorder %v750, 0.0004427343
        %v752 = vsel %vm751, %v749, %v746
        %v753 = vadd.f32 %v737, %v752
        %v754 = vsel %vm738, %v739, %v753
        %v755 = vmul.f32 %v754, %v646
        %757 = vrot.lane.b32.xlu0 %v755, 64
        %v758 = vpop.permute.xlu0 %757
        %761 = vrot.lane.b32.xlu0 %v726, 64
        %v762 = vpop.permute.xlu0 %761
        %v764 = vsel %vm655, %v754, %v758
        %765 = vst [vmem:[#allocation2] sm:$0xff] %v764
        %766 = vst.msk [vmem:[#allocation2 + $0x8] sm:$0xff] %vm483, %v762
        %v767 = vld [vmem:[#allocation9] sm:$0xff]
        %v768 = vld [vmem:[#allocation9 + $0x8] sm:$0xff]
        %v769 = vmul.f32 %v767, 1.442695
        %v770 = vpow.pop %v769
        %v771 = vmul.f32 %v768, 1.442695
        %v772 = vpow.pop %v771
        %v773 = vsub.f32 0.0, %v770
        %v774 = vsub.f32 0.0, %v772
        %s775 = smul.u32 0, 2
        %s776 = smul.addr %s775, 8
        %s777 = scalar_lea.vmem [#allocation2], %s776
        %v778 = vld [vmem:[%s777] sm:$0xff]
        %v779 = vld [vmem:[%s777 + $0x8] sm:$0xff]
        %v781 = vcombine.high %v778, %v778
        %v783 = vunpack.c.l.s4 1966171168
        %v784 = vunpack.c.0.s8 %v783
        %v785 = vlaneseq
        %v786 = vshrl.u32 %v785, 7
        %v787 = vsub.s32 %v784, %v786
        %v788 = vrot.slane %v778, %v787
        %v790 = vunpack.c.l.s4 1966171168
        %v791 = vunpack.c.0.s8 %v790
        %v792 = vlaneseq
        %v793 = vshrl.u32 %v792, 7
        %v794 = vsub.s32 %v791, %v793
        %v795 = vrot.slane %v781, %v794
        %v796 = vcombine.high %v788, %v788
        %v797 = vcombine.high %v795, %v795
        %v799 = vunpack.c.l.s4 1966171168
        %v800 = vunpack.c.0.s8 %v799
        %v801 = vlaneseq
        %v802 = vshrl.u32 %v801, 7
        %v803 = vsub.s32 %v800, %v802
        %v804 = vrot.slane %v788, %v803
        %v806 = vunpack.c.l.s4 1966171168
        %v807 = vunpack.c.0.s8 %v806
        %v808 = vlaneseq
        %v809 = vshrl.u32 %v808, 7
        %v810 = vsub.s32 %v807, %v809
        %v811 = vrot.slane %v795, %v810
        %v813 = vunpack.c.l.s4 1966171168
        %v814 = vunpack.c.0.s8 %v813
        %v815 = vlaneseq
        %v816 = vshrl.u32 %v815, 7
        %v817 = vsub.s32 %v814, %v816
        %v818 = vrot.slane %v796, %v817
        %v820 = vunpack.c.l.s4 1966171168
        %v821 = vunpack.c.0.s8 %v820
        %v822 = vlaneseq
        %v823 = vshrl.u32 %v822, 7
        %v824 = vsub.s32 %v821, %v823
        %v825 = vrot.slane %v797, %v824
        %v826 = vcombine.high %v804, %v804
        %v827 = vcombine.high %v811, %v811
        %v828 = vcombine.high %v818, %v818
        %v829 = vcombine.high %v825, %v825
        %v830 = vlaneseq
        %v831 = vshrl.u32 %v830, 7
        %v832 = vsub.s32 0, %v831
        %v833 = vrot.slane %v804, %v832
        %v834 = vlaneseq
        %v835 = vshrl.u32 %v834, 7
        %v836 = vsub.s32 0, %v835
        %v837 = vrot.slane %v818, %v836
        %v838 = vlaneseq
        %v839 = vshrl.u32 %v838, 7
        %v840 = vsub.s32 0, %v839
        %v841 = vrot.slane %v826, %v840
        %v842 = vlaneseq
        %v843 = vshrl.u32 %v842, 7
        %v844 = vsub.s32 0, %v843
        %v845 = vrot.slane %v828, %v844
        %v846 = vlaneseq
        %v847 = vshrl.u32 %v846, 7
        %v848 = vsub.s32 0, %v847
        %v849 = vrot.slane %v811, %v848
        %v850 = vlaneseq
        %v851 = vshrl.u32 %v850, 7
        %v852 = vsub.s32 0, %v851
        %v853 = vrot.slane %v825, %v852
        %v854 = vlaneseq
        %v855 = vshrl.u32 %v854, 7
        %v856 = vsub.s32 0, %v855
        %v857 = vrot.slane %v827, %v856
        %v858 = vlaneseq
        %v859 = vshrl.u32 %v858, 7
        %v860 = vsub.s32 0, %v859
        %v861 = vrot.slane %v829, %v860
        %v870 = vmul.f32 %v833, %v773
        %v871 = vmul.f32 %v833, %v774
        %v872 = vmul.f32 %v837, %v773
        %v873 = vmul.f32 %v837, %v774
        %v874 = vmul.f32 %v841, %v773
        %v875 = vmul.f32 %v841, %v774
        %v876 = vmul.f32 %v845, %v773
        %v877 = vmul.f32 %v845, %v774
        %v878 = vmul.f32 %v849, %v773
        %v879 = vmul.f32 %v849, %v774
        %v880 = vmul.f32 %v853, %v773
        %v881 = vmul.f32 %v853, %v774
        %v882 = vmul.f32 %v857, %v773
        %v883 = vmul.f32 %v857, %v774
        %v884 = vmul.f32 %v861, %v773
        %v885 = vmul.f32 %v861, %v774
        %v886 = vmul.f32 %v870, 1.442695
        %v887 = vpow.pop %v886
        %v888 = vmul.f32 %v871, 1.442695
        %v889 = vpow.pop %v888
        %v890 = vmul.f32 %v872, 1.442695
        %v891 = vpow.pop %v890
        %v892 = vmul.f32 %v873, 1.442695
        %v893 = vpow.pop %v892
        %v894 = vmul.f32 %v874, 1.442695
        %v895 = vpow.pop %v894
        %v896 = vmul.f32 %v875, 1.442695
        %v897 = vpow.pop %v896
        %v898 = vmul.f32 %v876, 1.442695
        %v899 = vpow.pop %v898
        %v900 = vmul.f32 %v877, 1.442695
        %v901 = vpow.pop %v900
        %v902 = vmul.f32 %v878, 1.442695
        %v903 = vpow.pop %v902
        %v904 = vmul.f32 %v879, 1.442695
        %v905 = vpow.pop %v904
        %v906 = vmul.f32 %v880, 1.442695
        %v907 = vpow.pop %v906
        %v908 = vmul.f32 %v881, 1.442695
        %v909 = vpow.pop %v908
        %v910 = vmul.f32 %v882, 1.442695
        %v911 = vpow.pop %v910
        %v912 = vmul.f32 %v883, 1.442695
        %v913 = vpow.pop %v912
        %v914 = vmul.f32 %v884, 1.442695
        %v915 = vpow.pop %v914
        %v916 = vmul.f32 %v885, 1.442695
        %v917 = vpow.pop %v916
        %v918 = vlaneseq
        %v919 = vshrl.u32 %v918, 7
        %v920 = vsub.s32 0, %v919
        %v921 = vrot.slane %v779, %v920
        %923 = vbcast.lane.b32.xlu0 %v921, 256
        %v924 = vpop.permute.xlu0 %923
        %s926 = sor.u32 256, 8
        %927 = vbcast.lane.b32.xlu0 %v921, %s926
        %v928 = vpop.permute.xlu0 %927
        %v929 = vlaneseq
        %v930 = vshrl.u32 %v929, 7
        %v931 = vsub.s32 1, %v930
        %v932 = vrot.slane %v779, %v931
        %934 = vbcast.lane.b32.xlu0 %v932, 256
        %v935 = vpop.permute.xlu0 %934
        %s937 = sor.u32 256, 8
        %938 = vbcast.lane.b32.xlu0 %v932, %s937
        %v939 = vpop.permute.xlu0 %938
        %v940 = vlaneseq
        %v941 = vshrl.u32 %v940, 7
        %v942 = vsub.s32 2, %v941
        %v943 = vrot.slane %v779, %v942
        %945 = vbcast.lane.b32.xlu0 %v943, 256
        %v946 = vpop.permute.xlu0 %945
        %s948 = sor.u32 256, 8
        %949 = vbcast.lane.b32.xlu0 %v943, %s948
        %v950 = vpop.permute.xlu0 %949
        %v951 = vlaneseq
        %v952 = vshrl.u32 %v951, 7
        %v953 = vsub.s32 3, %v952
        %v954 = vrot.slane %v779, %v953
        %956 = vbcast.lane.b32.xlu0 %v954, 256
        %v957 = vpop.permute.xlu0 %956
        %s959 = sor.u32 256, 8
        %960 = vbcast.lane.b32.xlu0 %v954, %s959
        %v961 = vpop.permute.xlu0 %960
        %v962 = vlaneseq
        %v963 = vshrl.u32 %v962, 7
        %v964 = vsub.s32 4, %v963
        %v965 = vrot.slane %v779, %v964
        %967 = vbcast.lane.b32.xlu0 %v965, 256
        %v968 = vpop.permute.xlu0 %967
        %s970 = sor.u32 256, 8
        %971 = vbcast.lane.b32.xlu0 %v965, %s970
        %v972 = vpop.permute.xlu0 %971
        %v973 = vlaneseq
        %v974 = vshrl.u32 %v973, 7
        %v975 = vsub.s32 5, %v974
        %v976 = vrot.slane %v779, %v975
        %978 = vbcast.lane.b32.xlu0 %v976, 256
        %v979 = vpop.permute.xlu0 %978
        %s981 = sor.u32 256, 8
        %982 = vbcast.lane.b32.xlu0 %v976, %s981
        %v983 = vpop.permute.xlu0 %982
        %v984 = vlaneseq
        %v985 = vshrl.u32 %v984, 7
        %v986 = vsub.s32 6, %v985
        %v987 = vrot.slane %v779, %v986
        %989 = vbcast.lane.b32.xlu0 %v987, 256
        %v990 = vpop.permute.xlu0 %989
        %s992 = sor.u32 256, 8
        %993 = vbcast.lane.b32.xlu0 %v987, %s992
        %v994 = vpop.permute.xlu0 %993
        %v995 = vlaneseq
        %v996 = vshrl.u32 %v995, 7
        %v997 = vsub.s32 7, %v996
        %v998 = vrot.slane %v779, %v997
        %1000 = vbcast.lane.b32.xlu0 %v998, 256
        %v1001 = vpop.permute.xlu0 %1000
        %s1003 = sor.u32 256, 8
        %1004 = vbcast.lane.b32.xlu0 %v998, %s1003
        %v1005 = vpop.permute.xlu0 %1004
        %v1006 = vmul.f32 %v924, %v833
        %v1007 = vmul.f32 %v928, %v833
        %v1008 = vmul.f32 %v935, %v837
        %v1009 = vmul.f32 %v939, %v837
        %v1010 = vmul.f32 %v946, %v841
        %v1011 = vmul.f32 %v950, %v841
        %v1012 = vmul.f32 %v957, %v845
        %v1013 = vmul.f32 %v961, %v845
        %v1014 = vmul.f32 %v968, %v849
        %v1015 = vmul.f32 %v972, %v849
        %v1016 = vmul.f32 %v979, %v853
        %v1017 = vmul.f32 %v983, %v853
        %v1018 = vmul.f32 %v990, %v857
        %v1019 = vmul.f32 %v994, %v857
        %v1020 = vmul.f32 %v1001, %v861
        %v1021 = vmul.f32 %v1005, %v861
        %v1022 = vmul.f32 %v887, 0.0
        %v1023 = vmul.f32 %v889, 0.0
        %1026 = vrot.lane.b32.xlu0 %v1006, 64
        %v1027 = vpop.permute.xlu0 %1026
        %1028 = vrot.lane.b32.xlu0 %v1007, 64
        %v1029 = vpop.permute.xlu0 %1028
        %v1032 = vadd.f32 %v1022, %v1027
        %v1033 = vadd.f32 %v1023, %v1029
        %v1034 = vmul.f32 %v891, %v1032
        %v1035 = vmul.f32 %v893, %v1033
        %1038 = vrot.lane.b32.xlu0 %v1008, 64
        %v1039 = vpop.permute.xlu0 %1038
        %1040 = vrot.lane.b32.xlu0 %v1009, 64
        %v1041 = vpop.permute.xlu0 %1040
        %v1044 = vadd.f32 %v1034, %v1039
        %v1045 = vadd.f32 %v1035, %v1041
        %v1046 = vmul.f32 %v895, %v1044
        %v1047 = vmul.f32 %v897, %v1045
        %1050 = vrot.lane.b32.xlu0 %v1010, 64
        %v1051 = vpop.permute.xlu0 %1050
        %1052 = vrot.lane.b32.xlu0 %v1011, 64
        %v1053 = vpop.permute.xlu0 %1052
        %v1056 = vadd.f32 %v1046, %v1051
        %v1057 = vadd.f32 %v1047, %v1053
        %v1058 = vmul.f32 %v899, %v1056
        %v1059 = vmul.f32 %v901, %v1057
        %1062 = vrot.lane.b32.xlu0 %v1012, 64
        %v1063 = vpop.permute.xlu0 %1062
        %1064 = vrot.lane.b32.xlu0 %v1013, 64
        %v1065 = vpop.permute.xlu0 %1064
        %v1068 = vadd.f32 %v1058, %v1063
        %v1069 = vadd.f32 %v1059, %v1065
        %v1070 = vmul.f32 %v903, %v1068
        %v1071 = vmul.f32 %v905, %v1069
        %1074 = vrot.lane.b32.xlu0 %v1014, 64
        %v1075 = vpop.permute.xlu0 %1074
        %1076 = vrot.lane.b32.xlu0 %v1015, 64
        %v1077 = vpop.permute.xlu0 %1076
        %v1080 = vadd.f32 %v1070, %v1075
        %v1081 = vadd.f32 %v1071, %v1077
        %v1082 = vmul.f32 %v907, %v1080
        %v1083 = vmul.f32 %v909, %v1081
        %1086 = vrot.lane.b32.xlu0 %v1016, 64
        %v1087 = vpop.permute.xlu0 %1086
        %1088 = vrot.lane.b32.xlu0 %v1017, 64
        %v1089 = vpop.permute.xlu0 %1088
        %v1092 = vadd.f32 %v1082, %v1087
        %v1093 = vadd.f32 %v1083, %v1089
        %v1094 = vmul.f32 %v911, %v1092
        %v1095 = vmul.f32 %v913, %v1093
        %1098 = vrot.lane.b32.xlu0 %v1018, 64
        %v1099 = vpop.permute.xlu0 %1098
        %1100 = vrot.lane.b32.xlu0 %v1019, 64
        %v1101 = vpop.permute.xlu0 %1100
        %v1104 = vadd.f32 %v1094, %v1099
        %v1105 = vadd.f32 %v1095, %v1101
        %v1106 = vmul.f32 %v915, %v1104
        %v1107 = vmul.f32 %v917, %v1105
        %1110 = vrot.lane.b32.xlu0 %v1020, 64
        %v1111 = vpop.permute.xlu0 %1110
        %1112 = vrot.lane.b32.xlu0 %v1021, 64
        %v1113 = vpop.permute.xlu0 %1112
        %v1116 = vadd.f32 %v1106, %v1111
        %v1117 = vadd.f32 %v1107, %v1113
        %s1119 = sor.u32 256, 16
        %1120 = vbcast.lane.b32.xlu0 %v921, %s1119
        %v1121 = vpop.permute.xlu0 %1120
        %s1123 = sor.u32 256, 24
        %1124 = vbcast.lane.b32.xlu0 %v921, %s1123
        %v1125 = vpop.permute.xlu0 %1124
        %s1127 = sor.u32 256, 16
        %1128 = vbcast.lane.b32.xlu0 %v932, %s1127
        %v1129 = vpop.permute.xlu0 %1128
        %s1131 = sor.u32 256, 24
        %1132 = vbcast.lane.b32.xlu0 %v932, %s1131
        %v1133 = vpop.permute.xlu0 %1132
        %s1135 = sor.u32 256, 16
        %1136 = vbcast.lane.b32.xlu0 %v943, %s1135
        %v1137 = vpop.permute.xlu0 %1136
        %s1139 = sor.u32 256, 24
        %1140 = vbcast.lane.b32.xlu0 %v943, %s1139
        %v1141 = vpop.permute.xlu0 %1140
        %s1143 = sor.u32 256, 16
        %1144 = vbcast.lane.b32.xlu0 %v954, %s1143
        %v1145 = vpop.permute.xlu0 %1144
        %s1147 = sor.u32 256, 24
        %1148 = vbcast.lane.b32.xlu0 %v954, %s1147
        %v1149 = vpop.permute.xlu0 %1148
        %s1151 = sor.u32 256, 16
        %1152 = vbcast.lane.b32.xlu0 %v965, %s1151
        %v1153 = vpop.permute.xlu0 %1152
        %s1155 = sor.u32 256, 24
        %1156 = vbcast.lane.b32.xlu0 %v965, %s1155
        %v1157 = vpop.permute.xlu0 %1156
        %s1159 = sor.u32 256, 16
        %1160 = vbcast.lane.b32.xlu0 %v976, %s1159
        %v1161 = vpop.permute.xlu0 %1160
        %s1163 = sor.u32 256, 24
        %1164 = vbcast.lane.b32.xlu0 %v976, %s1163
        %v1165 = vpop.permute.xlu0 %1164
        %s1167 = sor.u32 256, 16
        %1168 = vbcast.lane.b32.xlu0 %v987, %s1167
        %v1169 = vpop.permute.xlu0 %1168
        %s1171 = sor.u32 256, 24
        %1172 = vbcast.lane.b32.xlu0 %v987, %s1171
        %v1173 = vpop.permute.xlu0 %1172
        %s1175 = sor.u32 256, 16
        %1176 = vbcast.lane.b32.xlu0 %v998, %s1175
        %v1177 = vpop.permute.xlu0 %1176
        %s1179 = sor.u32 256, 24
        %1180 = vbcast.lane.b32.xlu0 %v998, %s1179
        %v1181 = vpop.permute.xlu0 %1180
        %v1182 = vmul.f32 %v1121, %v1032
        %v1183 = vmul.f32 %v1125, %v1033
        %v1184 = vmul.f32 %v1129, %v1044
        %v1185 = vmul.f32 %v1133, %v1045
        %v1186 = vmul.f32 %v1137, %v1056
        %v1187 = vmul.f32 %v1141, %v1057
        %v1188 = vmul.f32 %v1145, %v1068
        %v1189 = vmul.f32 %v1149, %v1069
        %v1190 = vmul.f32 %v1153, %v1080
        %v1191 = vmul.f32 %v1157, %v1081
        %v1192 = vmul.f32 %v1161, %v1092
        %v1193 = vmul.f32 %v1165, %v1093
        %v1194 = vmul.f32 %v1169, %v1104
        %v1195 = vmul.f32 %v1173, %v1105
        %v1196 = vmul.f32 %v1177, %v1116
        %v1197 = vmul.f32 %v1181, %v1117
        %v1198 = vsel %vm655, %v1182, 0.0
        %v1199 = vsel %vm655, %v1183, 0.0
        %v1200 = vadd.f32 %v1198, %v1199
        %v1201 = vrot.slane %v1200, 4
        %v1202 = vadd.f32 %v1200, %v1201
        %v1203 = vrot.slane %v1202, 2
        %v1204 = vadd.f32 %v1202, %v1203
        %v1205 = vrot.slane %v1204, 1
        %v1206 = vadd.f32 %v1204, %v1205
        %v1207 = vsel %vm655, %v1184, 0.0
        %v1208 = vsel %vm655, %v1185, 0.0
        %v1209 = vadd.f32 %v1207, %v1208
        %v1210 = vrot.slane %v1209, 4
        %v1211 = vadd.f32 %v1209, %v1210
        %v1212 = vrot.slane %v1211, 2
        %v1213 = vadd.f32 %v1211, %v1212
        %v1214 = vrot.slane %v1213, 1
        %v1215 = vadd.f32 %v1213, %v1214
        %v1216 = vsel %vm655, %v1186, 0.0
        %v1217 = vsel %vm655, %v1187, 0.0
        %v1218 = vadd.f32 %v1216, %v1217
        %v1219 = vrot.slane %v1218, 4
        %v1220 = vadd.f32 %v1218, %v1219
        %v1221 = vrot.slane %v1220, 2
        %v1222 = vadd.f32 %v1220, %v1221
        %v1223 = vrot.slane %v1222, 1
        %v1224 = vadd.f32 %v1222, %v1223
        %v1225 = vsel %vm655, %v1188, 0.0
        %v1226 = vsel %vm655, %v1189, 0.0
        %v1227 = vadd.f32 %v1225, %v1226
        %v1228 = vrot.slane %v1227, 4
        %v1229 = vadd.f32 %v1227, %v1228
        %v1230 = vrot.slane %v1229, 2
        %v1231 = vadd.f32 %v1229, %v1230
        %v1232 = vrot.slane %v1231, 1
        %v1233 = vadd.f32 %v1231, %v1232
        %v1234 = vsel %vm655, %v1190, 0.0
        %v1235 = vsel %vm655, %v1191, 0.0
        %v1236 = vadd.f32 %v1234, %v1235
        %v1237 = vrot.slane %v1236, 4
        %v1238 = vadd.f32 %v1236, %v1237
        %v1239 = vrot.slane %v1238, 2
        %v1240 = vadd.f32 %v1238, %v1239
        %v1241 = vrot.slane %v1240, 1
        %v1242 = vadd.f32 %v1240, %v1241
        %v1243 = vsel %vm655, %v1192, 0.0
        %v1244 = vsel %vm655, %v1193, 0.0
        %v1245 = vadd.f32 %v1243, %v1244
        %v1246 = vrot.slane %v1245, 4
        %v1247 = vadd.f32 %v1245, %v1246
        %v1248 = vrot.slane %v1247, 2
        %v1249 = vadd.f32 %v1247, %v1248
        %v1250 = vrot.slane %v1249, 1
        %v1251 = vadd.f32 %v1249, %v1250
        %v1252 = vsel %vm655, %v1194, 0.0
        %v1253 = vsel %vm655, %v1195, 0.0
        %v1254 = vadd.f32 %v1252, %v1253
        %v1255 = vrot.slane %v1254, 4
        %v1256 = vadd.f32 %v1254, %v1255
        %v1257 = vrot.slane %v1256, 2
        %v1258 = vadd.f32 %v1256, %v1257
        %v1259 = vrot.slane %v1258, 1
        %v1260 = vadd.f32 %v1258, %v1259
        %v1261 = vsel %vm655, %v1196, 0.0
        %v1262 = vsel %vm655, %v1197, 0.0
        %v1263 = vadd.f32 %v1261, %v1262
        %v1264 = vrot.slane %v1263, 4
        %v1265 = vadd.f32 %v1263, %v1264
        %v1266 = vrot.slane %v1265, 2
        %v1267 = vadd.f32 %v1265, %v1266
        %v1268 = vrot.slane %v1267, 1
        %v1269 = vadd.f32 %v1267, %v1268
        %vm1278 = vcmask 1041409
        %v1279 = vsel %vm1278, %v1215, %v1206
        %vm1280 = vcmask 1042434
        %v1281 = vsel %vm1280, %v1224, %v1279
        %vm1282 = vcmask 1043459
        %v1283 = vsel %vm1282, %v1233, %v1281
        %vm1284 = vcmask 1044484
        %v1285 = vsel %vm1284, %v1242, %v1283
        %vm1286 = vcmask 1045509
        %v1287 = vsel %vm1286, %v1251, %v1285
        %vm1288 = vcmask 1046534
        %v1289 = vsel %vm1288, %v1260, %v1287
        %vm1290 = vcmask 1047559
        %v1291 = vsel %vm1290, %v1269, %v1289
        %1293 = vst.msk [vmem:[#allocation3] sm:$0xff] %vm655, %v1291
        %v1294 = vld [vmem:[#allocation3] sm:$0xff]
        %v1295 = vld [vmem:[%s10] sm:$0x1]
        %v1297 = vlaneseq
        %v1298 = vshrl.u32 %v1297, 7
        %v1299 = vsub.s32 0, %v1298
        %v1300 = vrot.slane %v1295, %v1299
        %v1302 = vmul.f32 %v646, %v1300
        %v1303 = vadd.f32 %v1294, %v1302
        %v1304 = vxor.u32 %v588, 2147483648
        %v1305 = vmul.f32 %v1304, 1.442695
        %v1306 = vpow.pop %v1305
        %v1307 = vadd.f32 %v1306, 1.0
        %v1308 = vrcp.pop %v1307
        %v1309 = vmul.f32 1.0, %v1308
        %v1310 = vmul.f32 %v588, %v1309
        %1312 = vrot.lane.b32.xlu0 %v1310, 64
        %v1313 = vpop.permute.xlu0 %1312
        %v1315 = vmul.f32 %v1303, %v1313
        %v1316 = vld [vmem:[%s11] sm:$0xff]
        %v1317 = vld [vmem:[%s11 + $0x8] sm:$0xff]
        %v1318 = vld [vmem:[%s11 + $0x10] sm:$0xff]
        %v1319 = vld [vmem:[%s11 + $0x18] sm:$0xff]
        %v1320 = vld [vmem:[%s11 + $0x20] sm:$0xff]
        %v1321 = vld [vmem:[%s11 + $0x28] sm:$0xff]
        %v1322 = vld [vmem:[%s11 + $0x30] sm:$0xff]
        %v1323 = vld [vmem:[%s11 + $0x38] sm:$0xff]
        %v1325 = vsel %vm655, %v1315, 0
        %1327 = vmatprep.subr.mxu0 0.0
        %1328 = vmatpush1.msra.mxu0 %v1316
        %1329 = vmatprep.subr.mxu0 0.0
        %1330 = vmatpush1.msra.mxu0 %v1317
        %1331 = vmatprep.subr.mxu0 0.0
        %1332 = vmatpush1.msra.mxu0 %v1318
        %1333 = vmatprep.subr.mxu0 0.0
        %1334 = vmatpush1.msra.mxu0 %v1319
        %1335 = vmatprep.subr.mxu0 0.0
        %1336 = vmatpush1.msra.mxu0 %v1320
        %1337 = vmatprep.subr.mxu0 0.0
        %1338 = vmatpush1.msra.mxu0 %v1321
        %1339 = vmatprep.subr.mxu0 0.0
        %1340 = vmatpush1.msra.mxu0 %v1322
        %1341 = vmatprep.subr.mxu0 0.0
        %1342 = vmatpush1.msra.mxu0 %v1323
        %1343 = vmatprep.subr.mxu0 0.0
        %1344 = vmatpush1.msra.mxu0 0.0
        %1345 = vmatprep.subr.mxu0 0.0
        %1346 = vmatpush1.msra.mxu0 0.0
        %1347 = vmatprep.subr.mxu0 0.0
        %1348 = vmatpush1.msra.mxu0 0.0
        %1349 = vmatprep.subr.mxu0 0.0
        %1350 = vmatpush1.msra.mxu0 0.0
        %1351 = vmatprep.subr.mxu0 0.0
        %1352 = vmatpush1.msra.mxu0 0.0
        %1353 = vmatprep.subr.mxu0 0.0
        %1354 = vmatpush1.msra.mxu0 0.0
        %1355 = vmatprep.subr.mxu0 0.0
        %1356 = vmatpush1.msra.mxu0 0.0
        %1357 = vmatprep.subr.mxu0 0.0
        %1358 = vmatpush1.msra.mxu0 0.0
        %1359 = vmatprep.subr.mxu0 0.0
        %1360 = vmatpush1.msra.mxu0 0.0
        %1361 = vmatprep.subr.mxu0 0.0
        %1362 = vmatpush1.msra.mxu0 0.0
        %1363 = vmatprep.subr.mxu0 0.0
        %1364 = vmatpush1.msra.mxu0 0.0
        %1365 = vmatprep.subr.mxu0 0.0
        %1366 = vmatpush1.msra.mxu0 0.0
        %1367 = vmatprep.subr.mxu0 0.0
        %1368 = vmatpush1.msra.mxu0 0.0
        %1369 = vmatprep.subr.mxu0 0.0
        %1370 = vmatpush1.msra.mxu0 0.0
        %1371 = vmatprep.subr.mxu0 0.0
        %1372 = vmatpush1.msra.mxu0 0.0
        %1373 = vmatprep.subr.mxu0 0.0
        %1374 = vmatpush1.msra.mxu0 0.0
        %1375 = vmatprep.subr.mxu0 0.0
        %1376 = vmatpush1.msra.mxu0 0.0
        %1377 = vmatprep.subr.mxu0 0.0
        %1378 = vmatpush1.msra.mxu0 0.0
        %1379 = vmatprep.subr.mxu0 0.0
        %1380 = vmatpush1.msra.mxu0 0.0
        %1381 = vmatprep.subr.mxu0 0.0
        %1382 = vmatpush1.msra.mxu0 0.0
        %1383 = vmatprep.subr.mxu0 0.0
        %1384 = vmatpush1.msra.mxu0 0.0
        %1385 = vmatprep.subr.mxu0 0.0
        %1386 = vmatpush1.msra.mxu0 0.0
        %1387 = vmatprep.subr.mxu0 0.0
        %1388 = vmatpush1.msra.mxu0 0.0
        %1389 = vmatprep.subr.mxu0 0.0
        %1390 = vmatpush1.msra.mxu0 0.0
        %1391 = vmatprep.mubr.f32.mxu0 0.0
        %1392 = vmatmul.mubr.f32.gmra.mrb[0].mxu0 %v1325
        %v1393 = vpop.f32.mrb[0].mxu0
        %v1394 = vadd.f32 0.0, %v1393
        %v1395 = vpop.f32.mrb[0].mxu0
        %1396 = vdwg.mxu0
        %1398 = vrot.lane.b32.xlu0 %v482, 32
        %v1399 = vpop.permute.xlu0 %1398
        %v1401 = vsel %vm483, %v1394, %v1399
        %1402 = vst.msk [vmem:[%s479] sm:$0xff] %vm655, %v1401
        %s1403 = sand.u32 %s302, 1
        %s1404 = scalar_lea.sflag [#allocation6], %s1403
        %s1405 = sand.u32 %s302, 1
        %s1406 = smul.addr %s1405, 8
        %s1407 = scalar_lea.vmem [#allocation10], %s1406
        // Predicated region
        $region81: #{tpu_custom_call.1} parent=67 // pred_check
          %p1408 = pneg %p312
        $region82: #{tpu_custom_call.1} parent=67 // pred_check_branch
          %1410 = sbr.rel (%p1408) target = $region84
        $region83: #{tpu_custom_call.1} parent=67 // pred_region
          %s1412 = ssub.s32 128, 128
          %1413 = vsyncadd %s1404, %s1412
          %s1414 = smul.addr %s32, 128
          %s1415 = scalar_lea.hbm %s12, %s1414
          %s1417 = sshll.u32 %s1407, 4
          %s1418 = int_to_ptr.vmem [resolvable:$true] %s1417
          %1420 = dma.vmem_to_hbm [thread:$0]  %s1418, 128, %s1415, %s1404
        $region84: #{tpu_custom_call.1} parent=67 // pred_fallthru
          _
      $region68: #{tpu_custom_call.1} parent=5 // pred_fallthru
        _
      %p1421 = scmp.le.s32.totalorder 2, %s27
      // Predicated region
      $region85: #{tpu_custom_call.1} parent=5 // pred_check
        %p1422 = pneg %p1421
      $region86: #{tpu_custom_call.1} parent=5 // pred_check_branch
        %1424 = sbr.rel (%p1422) target = $region88
      $region87: #{tpu_custom_call.1} parent=5 // pred_region
        %s1425 = ssub.s32 %s27, 2
        // Predicated region
        $region89: #{tpu_custom_call.1} parent=87 // pred_check
          %p1426 = pneg %p318
        $region90: #{tpu_custom_call.1} parent=87 // pred_check_branch
          %1428 = sbr.rel (%p1426) target = $region92
        $region91: #{tpu_custom_call.1} parent=87 // pred_region
          %s1429 = sand.u32 %s303, 1
          %s1430 = scalar_lea.sflag [#allocation6], %s1429
          %s1431 = sand.u32 %s303, 1
          %s1432 = smul.addr %s1431, 8
          %s1433 = scalar_lea.vmem [#allocation10], %s1432
          %1434 = dma.done %s1430, 128
        $region92: #{tpu_custom_call.1} parent=87 // pred_fallthru
          _
      $region88: #{tpu_custom_call.1} parent=5 // pred_fallthru
        _
    $region6: #{tpu_custom_call.1} parent=1 // loop_footer
      %s31 = sadd.s32 1, %s27
    $region7: #{tpu_custom_call.1} parent=1 // loop_footer_branch
      %26 = sbr.rel target = $region3
    $region8: #{tpu_custom_call.1} parent=1 // loop_exit
      _
    %1435 = vsyncpa [#allocation5], 1
    %s1436 = scalar_lea.sflag [#allocation5], 1
    %1437 = vsyncpa %s1436, 1
    %1438 = vsyncpa [#allocation8], 1
    %s1439 = scalar_lea.sflag [#allocation8], 1
    %1440 = vsyncpa %s1439, 1
    %1441 = vsyncpa [#allocation6], 1
    %s1442 = scalar_lea.sflag [#allocation6], 1
    %1443 = vsyncpa %s1442, 1

</llo_original>
